<compile_context>
chip_gen: v6e
topology: v6e:2x2x1
jax: 0.10.0
libtpu: 0.0.40
codegen_flags: <defaults>
</compile_context>

<pallas_src>
import jax
import jax.numpy as jnp
from jax import lax
from jax.experimental import pallas as pl
from jax.experimental.pallas import tpu as pltpu

EMB_SIZE = 10

# padded / tile sizes
D_X_PAD = 128     # "other" feature columns, padded to one full lane group
H2_PAD = 128      # h2 = 64 -> 128 lanes
N_PAD = 128       # n_actions = 1 -> lane-dense output


# ----------------------------- Pallas kernel ------------------------------ #
def _make_qnet_kernel(n_stations, ns_pad):
    def kernel(st_ref,                    # VMEM (TB, S)            int32
               x_ref,                     # VMEM (TB, D_X_PAD)      bf16
               w1x_ref,                   # VMEM (D_X_PAD, H1)      bf16
               b1_ref,                    # VMEM (1, H1)            f32
               tabs_ref,                  # VMEM (S, NS_PAD, H1)    bf16 (emb @ W1_emb)
               w2_ref,                    # VMEM (H1, H2_PAD)       bf16
               b2_ref,                    # VMEM (1, H2_PAD)        f32
               w3r_ref,                   # VMEM (1, H2_PAD)        f32 (out column as row)
               b3_ref,                    # SMEM (1,)               f32
               o_ref):                    # VMEM (TB, N_PAD)        f32
        tb = x_ref.shape[0]

        # fc1, "other"-features half: bf16 MXU matmul, f32 accumulation.
        h = jnp.dot(x_ref[...], w1x_ref[...], preferred_element_type=jnp.float32)

        # Embedding gather + fc1 embedding half as one-hot MXU matmuls.
        st = st_ref[...]                                          # (TB, S) int32
        iota = lax.broadcasted_iota(jnp.int32, (tb, ns_pad), 1)   # lane iota
        for s in range(n_stations):                               # statically unrolled
            onehot = (st[:, s:s + 1] == iota).astype(jnp.bfloat16)   # (TB, NS_PAD)
            h = h + jnp.dot(onehot, tabs_ref[s],
                            preferred_element_type=jnp.float32)

        # bias + ReLU in f32 (VPU)
        h = jnp.maximum(h + b1_ref[...], 0.0)

        # fc2 + ReLU (padded h2 lanes stay exactly 0: zero weight cols + zero bias)
        h = jnp.dot(h.astype(jnp.bfloat16), w2_ref[...],
                    preferred_element_type=jnp.float32)
        h = jnp.maximum(h + b2_ref[...], 0.0)

        # out layer (N=1): VPU multiply + lane reduction (f32), lane-dense store.
        o = jnp.sum(h * w3r_ref[...], axis=-1, keepdims=True) + b3_ref[0]
        o_ref[...] = jnp.broadcast_to(o, o_ref.shape).astype(o_ref.dtype)

    return kernel


def qnet_mlp_pallas(stations_pad, x_pad, w1x, b1, tabs, w2, b2, w3r, b3, tb):
    """stations_pad: (B_pad, S) int32; x_pad: (B_pad, D_X_PAD) bf16; weights pre-packed."""
    b_pad = x_pad.shape[0]
    assert b_pad % tb == 0
    n_tiles = b_pad // tb
    n_stations, ns_pad, _ = tabs.shape
    assert stations_pad.shape[1] == n_stations

    kernel = _make_qnet_kernel(n_stations, ns_pad)

    grid_spec = pltpu.PrefetchScalarGridSpec(
        num_scalar_prefetch=0,
        grid=(n_tiles,),
        in_specs=[
            pl.BlockSpec((tb, n_stations), lambda i: (i, 0)),     # stations tile (int32)
            pl.BlockSpec((tb, x_pad.shape[1]), lambda i: (i, 0)),  # x tile (bf16)
            pl.BlockSpec(w1x.shape, lambda i: (0, 0)),            # resident weights
            pl.BlockSpec(b1.shape, lambda i: (0, 0)),
            pl.BlockSpec(tabs.shape, lambda i: (0, 0, 0)),
            pl.BlockSpec(w2.shape, lambda i: (0, 0)),
            pl.BlockSpec(b2.shape, lambda i: (0, 0)),
            pl.BlockSpec(w3r.shape, lambda i: (0, 0)),
            pl.BlockSpec(memory_space=pltpu.MemorySpace.SMEM),    # b3 scalar
        ],
        out_specs=pl.BlockSpec((tb, N_PAD), lambda i: (i, 0)),
    )

    return pl.pallas_call(
        kernel,
        out_shape=jax.ShapeDtypeStruct((b_pad, N_PAD), jnp.float32),
        grid_spec=grid_spec,
        compiler_params=pltpu.CompilerParams(
            dimension_semantics=("parallel",)),   # shards batch tiles across v7x TCs
    )(stations_pad, x_pad, w1x, b1, tabs, w2, b2, w3r, b3)


# ------------------------------ Q_Net module ------------------------------ #
def init_qnet_params(key, num_states, car_num, n_actions=1, h1=256, h2=64):
    other_size = num_states + 2 - 2 * car_num - 2          # = num_states - 2*car_num
    n_stations = 2 * car_num + 2
    d_in = other_size + EMB_SIZE * n_stations
    ks = jax.random.split(key, 7)
    std = 0.1
    params = {
        # weights stored [in, out] (transposed vs. torch Linear), normal(0, 0.1)
        "w1": jax.random.normal(ks[0], (d_in, h1), jnp.float32) * std,
        "b1": jax.random.normal(ks[1], (1, h1), jnp.float32) * 0.01,
        "w2": jax.random.normal(ks[2], (h1, h2), jnp.float32) * std,
        "b2": jax.random.normal(ks[3], (1, h2), jnp.float32) * 0.01,
        "w3": jax.random.normal(ks[4], (h2, n_actions), jnp.float32) * std,
        "b3": jax.random.normal(ks[5], (1, n_actions), jnp.float32) * 0.01,
        "emb": jax.random.normal(ks[6], (num_states, EMB_SIZE), jnp.float32) * std,
    }
    return params, other_size, n_stations


def pack_qnet_params(params, other_size, n_stations):
    """One-time weight transform: split/pad fc1, fold emb table through fc1,
    pad lanes, pad station axis to a 128-lane one-hot width, cast MXU operands to bf16."""
    num_states = params["emb"].shape[0]
    h1 = params["w1"].shape[1]
    h2 = params["w2"].shape[1]
    assert params["w3"].shape[1] == 1
    assert other_size <= D_X_PAD and h2 <= H2_PAD
    ns_pad = max(128, -(-num_states // 128) * 128)   # one-hot lane width per slot

    w1_x = params["w1"][:other_size]                                  # (other, h1)
    w1_e = params["w1"][other_size:].reshape(n_stations, EMB_SIZE, h1)
    # tabs[s, n, :] = emb[n] @ W1_emb_slot_s  -> one-hot matmul gather in-kernel
    tabs = jnp.einsum("ne,seh->snh", params["emb"], w1_e)             # (S, NS, h1)
    tabs = jnp.zeros((n_stations, ns_pad, h1), jnp.float32).at[:, :num_states, :].set(tabs)

    w1x = jnp.zeros((D_X_PAD, h1), jnp.float32).at[:other_size].set(w1_x)
    w2 = jnp.zeros((h1, H2_PAD), jnp.float32).at[:, :h2].set(params["w2"])
    b2 = jnp.zeros((1, H2_PAD), jnp.float32).at[:, :h2].set(params["b2"])
    w3r = jnp.zeros((1, H2_PAD), jnp.float32).at[:, :h2].set(params["w3"][:, 0][None, :])

    return {
        "w1x": w1x.astype(jnp.bfloat16),      # bf16 MXU operands, f32 accumulation
        "tabs": tabs.astype(jnp.bfloat16),
        "w2": w2.astype(jnp.bfloat16),
        "b1": params["b1"],                   # f32 bias/ReLU on VPU
        "b2": b2,
        "w3r": w3r,                           # f32 VPU reduction for the N=1 out layer
        "b3": params["b3"].reshape(1),        # (1,) f32 scalar -> SMEM
    }


def _choose_tile(batch):
    """Batch tile: one small tile for tiny batches; 256/512-row tiles otherwise so
    large batches get >=2 grid steps (pipelining + both v7x TensorCores)."""
    b8 = -(-batch // 8) * 8
    if b8 <= 256:
        return b8, b8
    tb = 256 if b8 <= 2048 else 512
    return tb, -(-b8 // tb) * tb


def q_net_forward(packed, x, stations):
    """x: (B, OTHER_SIZE) f32, stations: (B, 2*car_num+2) int. Returns (B, 1) f32."""
    B, other = x.shape
    tb, b_pad = _choose_tile(B)
    x_pad = jnp.zeros((b_pad, D_X_PAD), jnp.bfloat16).at[:B, :other].set(
        x.astype(jnp.bfloat16))
    st_pad = jnp.zeros((b_pad, stations.shape[1]), jnp.int32).at[:B].set(
        stations.astype(jnp.int32))
    out = qnet_mlp_pallas(st_pad, x_pad,
                          packed["w1x"], packed["b1"], packed["tabs"],
                          packed["w2"], packed["b2"], packed["w3r"], packed["b3"],
                          tb)
    return out[:B, :1]


# pure-JAX reference (original unfused f32 math) for a sanity check
def q_net_forward_ref(params, x, stations):
    emb = jnp.take(params["emb"], stations, axis=0).reshape(x.shape[0], -1)
    xin = jnp.concatenate([x, emb], axis=1)
    h1 = jnp.maximum(xin @ params["w1"] + params["b1"], 0.0)
    h2 = jnp.maximum(h1 @ params["w2"] + params["b2"], 0.0)
    return h2 @ params["w3"] + params["b3"]


if __name__ == "__main__":
    NUM_STATES = 20
    CAR_NUM = 3
    N_ACTIONS = 1
    BATCH = 2

    key = jax.random.PRNGKey(0)
    k_param, k_x, k_st = jax.random.split(key, 3)

    params, other_size, n_stations = init_qnet_params(
        k_param, NUM_STATES, CAR_NUM, N_ACTIONS)
    packed = pack_qnet_params(params, other_size, n_stations)

    x = jax.random.normal(k_x, (BATCH, other_size), jnp.float32)          # (2, 14)
    stations = jax.random.randint(k_st, (BATCH, n_stations), 0, NUM_STATES,
                                  dtype=jnp.int32)                        # (2, 8)

    out = jax.block_until_ready(q_net_forward(packed, x, stations))
    ref = jax.block_until_ready(q_net_forward_ref(params, x, stations))

    assert out.shape == (BATCH, N_ACTIONS)
    # bf16 MXU operands with f32 accumulation -> looser tolerance than pure-f32.
    assert jnp.allclose(out, ref, atol=2e-2, rtol=2e-2), (out, ref)

    print("KERNEL_OK")
</pallas_src>

<mosaic_0001>
module attributes {stable_mosaic.version = 11 : i64} {
  func.func @kernel(%arg0: i32, %arg1: memref<8x8xi32, #tpu.memory_space<vmem>>, %arg2: memref<8x128xbf16, #tpu.memory_space<vmem>>, %arg3: memref<128x256xbf16, #tpu.memory_space<vmem>>, %arg4: memref<1x256xf32, #tpu.memory_space<vmem>>, %arg5: memref<8x128x256xbf16, #tpu.memory_space<vmem>>, %arg6: memref<256x128xbf16, #tpu.memory_space<vmem>>, %arg7: memref<1x128xf32, #tpu.memory_space<vmem>>, %arg8: memref<1x128xf32, #tpu.memory_space<vmem>>, %arg9: memref<1xf32, #tpu.memory_space<smem>>, %arg10: memref<8x128xf32, #tpu.memory_space<vmem>>) attributes {dimension_semantics = [#tpu.dimension_semantics<parallel>], iteration_bounds = array<i64: 1>, scalar_prefetch = 0 : i64, scratch_operands = 0 : i64, tpu.core_type = #tpu.core_type<tc>, window_params = [{transform_indices = @transform_0, window_bounds = array<i64: 8, 8>}, {transform_indices = @transform_1, window_bounds = array<i64: 8, 128>}, {pipeline_mode = #tpu.pipeline_mode<synchronous>, transform_indices = @transform_2, window_bounds = array<i64: 128, 256>}, {pipeline_mode = #tpu.pipeline_mode<synchronous>, transform_indices = @transform_3, window_bounds = array<i64: 1, 256>}, {pipeline_mode = #tpu.pipeline_mode<synchronous>, transform_indices = @transform_4, window_bounds = array<i64: 8, 128, 256>}, {pipeline_mode = #tpu.pipeline_mode<synchronous>, transform_indices = @transform_5, window_bounds = array<i64: 256, 128>}, {pipeline_mode = #tpu.pipeline_mode<synchronous>, transform_indices = @transform_6, window_bounds = array<i64: 1, 128>}, {pipeline_mode = #tpu.pipeline_mode<synchronous>, transform_indices = @transform_7, window_bounds = array<i64: 1, 128>}, {transform_indices = @transform_8, window_bounds = array<i64: 1>}, {transform_indices = @transform_9, window_bounds = array<i64: 8, 128>}]} {
    %c0 = arith.constant 0 : index
    %c0_0 = arith.constant 0 : index
    %0 = vector.load %arg2[%c0, %c0_0] : memref<8x128xbf16, #tpu.memory_space<vmem>>, vector<8x128xbf16>
    %c0_1 = arith.constant 0 : index
    %c0_2 = arith.constant 0 : index
    %1 = vector.load %arg3[%c0_1, %c0_2] : memref<128x256xbf16, #tpu.memory_space<vmem>>, vector<128x256xbf16>
    %cst = arith.constant dense<0.000000e+00> : vector<8x256xf32>
    %2 = tpu.matmul %0, %1, %cst {dimension_numbers = #tpu.dot_dimension_numbers<[1], [0], [0], [1], [0, 0, 1, 1], [], []>} : vector<8x128xbf16>, vector<128x256xbf16>, vector<8x256xf32> -> vector<8x256xf32>
    %c0_3 = arith.constant 0 : index
    %c0_4 = arith.constant 0 : index
    %3 = vector.load %arg1[%c0_3, %c0_4] : memref<8x8xi32, #tpu.memory_space<vmem>>, vector<8x8xi32>
    %4 = tpu.iota {dimensions = array<i32: 1>} : vector<8x128xi32>
    %5 = vector.extract_strided_slice %3 {offsets = [0, 0], sizes = [8, 1], strides = [1, 1]} : vector<8x8xi32> to vector<8x1xi32>
    %6 = vector.broadcast %5 : vector<8x1xi32> to vector<8x128xi32>
    %7 = arith.cmpi eq, %6, %4 : vector<8x128xi32>
    %8 = arith.extui %7 : vector<8x128xi1> to vector<8x128xi32>
    %9 = arith.sitofp %8 : vector<8x128xi32> to vector<8x128xf32>
    %10 = arith.truncf %9 : vector<8x128xf32> to vector<8x128xbf16>
    %c0_5 = arith.constant 0 : index
    %c0_6 = arith.constant 0 : index
    %c0_7 = arith.constant 0 : index
    %11 = vector.load %arg5[%c0_5, %c0_6, %c0_7] : memref<8x128x256xbf16, #tpu.memory_space<vmem>>, vector<1x128x256xbf16>
    %12 = vector.shape_cast %11 : vector<1x128x256xbf16> to vector<128x256xbf16>
    %cst_8 = arith.constant dense<0.000000e+00> : vector<8x256xf32>
    %13 = tpu.matmul %10, %12, %cst_8 {dimension_numbers = #tpu.dot_dimension_numbers<[1], [0], [0], [1], [0, 0, 1, 1], [], []>} : vector<8x128xbf16>, vector<128x256xbf16>, vector<8x256xf32> -> vector<8x256xf32>
    %14 = arith.addf %2, %13 : vector<8x256xf32>
    %15 = vector.extract_strided_slice %3 {offsets = [0, 1], sizes = [8, 1], strides = [1, 1]} : vector<8x8xi32> to vector<8x1xi32>
    %16 = vector.broadcast %15 : vector<8x1xi32> to vector<8x128xi32>
    %17 = arith.cmpi eq, %16, %4 : vector<8x128xi32>
    %18 = arith.extui %17 : vector<8x128xi1> to vector<8x128xi32>
    %19 = arith.sitofp %18 : vector<8x128xi32> to vector<8x128xf32>
    %20 = arith.truncf %19 : vector<8x128xf32> to vector<8x128xbf16>
    %c1 = arith.constant 1 : index
    %c0_9 = arith.constant 0 : index
    %c0_10 = arith.constant 0 : index
    %21 = vector.load %arg5[%c1, %c0_9, %c0_10] : memref<8x128x256xbf16, #tpu.memory_space<vmem>>, vector<1x128x256xbf16>
    %22 = vector.shape_cast %21 : vector<1x128x256xbf16> to vector<128x256xbf16>
    %cst_11 = arith.constant dense<0.000000e+00> : vector<8x256xf32>
    %23 = tpu.matmul %20, %22, %cst_11 {dimension_numbers = #tpu.dot_dimension_numbers<[1], [0], [0], [1], [0, 0, 1, 1], [], []>} : vector<8x128xbf16>, vector<128x256xbf16>, vector<8x256xf32> -> vector<8x256xf32>
    %24 = arith.addf %14, %23 : vector<8x256xf32>
    %25 = vector.extract_strided_slice %3 {offsets = [0, 2], sizes = [8, 1], strides = [1, 1]} : vector<8x8xi32> to vector<8x1xi32>
    %26 = vector.broadcast %25 : vector<8x1xi32> to vector<8x128xi32>
    %27 = arith.cmpi eq, %26, %4 : vector<8x128xi32>
    %28 = arith.extui %27 : vector<8x128xi1> to vector<8x128xi32>
    %29 = arith.sitofp %28 : vector<8x128xi32> to vector<8x128xf32>
    %30 = arith.truncf %29 : vector<8x128xf32> to vector<8x128xbf16>
    %c2 = arith.constant 2 : index
    %c0_12 = arith.constant 0 : index
    %c0_13 = arith.constant 0 : index
    %31 = vector.load %arg5[%c2, %c0_12, %c0_13] : memref<8x128x256xbf16, #tpu.memory_space<vmem>>, vector<1x128x256xbf16>
    %32 = vector.shape_cast %31 : vector<1x128x256xbf16> to vector<128x256xbf16>
    %cst_14 = arith.constant dense<0.000000e+00> : vector<8x256xf32>
    %33 = tpu.matmul %30, %32, %cst_14 {dimension_numbers = #tpu.dot_dimension_numbers<[1], [0], [0], [1], [0, 0, 1, 1], [], []>} : vector<8x128xbf16>, vector<128x256xbf16>, vector<8x256xf32> -> vector<8x256xf32>
    %34 = arith.addf %24, %33 : vector<8x256xf32>
    %35 = vector.extract_strided_slice %3 {offsets = [0, 3], sizes = [8, 1], strides = [1, 1]} : vector<8x8xi32> to vector<8x1xi32>
    %36 = vector.broadcast %35 : vector<8x1xi32> to vector<8x128xi32>
    %37 = arith.cmpi eq, %36, %4 : vector<8x128xi32>
    %38 = arith.extui %37 : vector<8x128xi1> to vector<8x128xi32>
    %39 = arith.sitofp %38 : vector<8x128xi32> to vector<8x128xf32>
    %40 = arith.truncf %39 : vector<8x128xf32> to vector<8x128xbf16>
    %c3 = arith.constant 3 : index
    %c0_15 = arith.constant 0 : index
    %c0_16 = arith.constant 0 : index
    %41 = vector.load %arg5[%c3, %c0_15, %c0_16] : memref<8x128x256xbf16, #tpu.memory_space<vmem>>, vector<1x128x256xbf16>
    %42 = vector.shape_cast %41 : vector<1x128x256xbf16> to vector<128x256xbf16>
    %cst_17 = arith.constant dense<0.000000e+00> : vector<8x256xf32>
    %43 = tpu.matmul %40, %42, %cst_17 {dimension_numbers = #tpu.dot_dimension_numbers<[1], [0], [0], [1], [0, 0, 1, 1], [], []>} : vector<8x128xbf16>, vector<128x256xbf16>, vector<8x256xf32> -> vector<8x256xf32>
    %44 = arith.addf %34, %43 : vector<8x256xf32>
    %45 = vector.extract_strided_slice %3 {offsets = [0, 4], sizes = [8, 1], strides = [1, 1]} : vector<8x8xi32> to vector<8x1xi32>
    %46 = vector.broadcast %45 : vector<8x1xi32> to vector<8x128xi32>
    %47 = arith.cmpi eq, %46, %4 : vector<8x128xi32>
    %48 = arith.extui %47 : vector<8x128xi1> to vector<8x128xi32>
    %49 = arith.sitofp %48 : vector<8x128xi32> to vector<8x128xf32>
    %50 = arith.truncf %49 : vector<8x128xf32> to vector<8x128xbf16>
    %c4 = arith.constant 4 : index
    %c0_18 = arith.constant 0 : index
    %c0_19 = arith.constant 0 : index
    %51 = vector.load %arg5[%c4, %c0_18, %c0_19] : memref<8x128x256xbf16, #tpu.memory_space<vmem>>, vector<1x128x256xbf16>
    %52 = vector.shape_cast %51 : vector<1x128x256xbf16> to vector<128x256xbf16>
    %cst_20 = arith.constant dense<0.000000e+00> : vector<8x256xf32>
    %53 = tpu.matmul %50, %52, %cst_20 {dimension_numbers = #tpu.dot_dimension_numbers<[1], [0], [0], [1], [0, 0, 1, 1], [], []>} : vector<8x128xbf16>, vector<128x256xbf16>, vector<8x256xf32> -> vector<8x256xf32>
    %54 = arith.addf %44, %53 : vector<8x256xf32>
    %55 = vector.extract_strided_slice %3 {offsets = [0, 5], sizes = [8, 1], strides = [1, 1]} : vector<8x8xi32> to vector<8x1xi32>
    %56 = vector.broadcast %55 : vector<8x1xi32> to vector<8x128xi32>
    %57 = arith.cmpi eq, %56, %4 : vector<8x128xi32>
    %58 = arith.extui %57 : vector<8x128xi1> to vector<8x128xi32>
    %59 = arith.sitofp %58 : vector<8x128xi32> to vector<8x128xf32>
    %60 = arith.truncf %59 : vector<8x128xf32> to vector<8x128xbf16>
    %c5 = arith.constant 5 : index
    %c0_21 = arith.constant 0 : index
    %c0_22 = arith.constant 0 : index
    %61 = vector.load %arg5[%c5, %c0_21, %c0_22] : memref<8x128x256xbf16, #tpu.memory_space<vmem>>, vector<1x128x256xbf16>
    %62 = vector.shape_cast %61 : vector<1x128x256xbf16> to vector<128x256xbf16>
    %cst_23 = arith.constant dense<0.000000e+00> : vector<8x256xf32>
    %63 = tpu.matmul %60, %62, %cst_23 {dimension_numbers = #tpu.dot_dimension_numbers<[1], [0], [0], [1], [0, 0, 1, 1], [], []>} : vector<8x128xbf16>, vector<128x256xbf16>, vector<8x256xf32> -> vector<8x256xf32>
    %64 = arith.addf %54, %63 : vector<8x256xf32>
    %65 = vector.extract_strided_slice %3 {offsets = [0, 6], sizes = [8, 1], strides = [1, 1]} : vector<8x8xi32> to vector<8x1xi32>
    %66 = vector.broadcast %65 : vector<8x1xi32> to vector<8x128xi32>
    %67 = arith.cmpi eq, %66, %4 : vector<8x128xi32>
    %68 = arith.extui %67 : vector<8x128xi1> to vector<8x128xi32>
    %69 = arith.sitofp %68 : vector<8x128xi32> to vector<8x128xf32>
    %70 = arith.truncf %69 : vector<8x128xf32> to vector<8x128xbf16>
    %c6 = arith.constant 6 : index
    %c0_24 = arith.constant 0 : index
    %c0_25 = arith.constant 0 : index
    %71 = vector.load %arg5[%c6, %c0_24, %c0_25] : memref<8x128x256xbf16, #tpu.memory_space<vmem>>, vector<1x128x256xbf16>
    %72 = vector.shape_cast %71 : vector<1x128x256xbf16> to vector<128x256xbf16>
    %cst_26 = arith.constant dense<0.000000e+00> : vector<8x256xf32>
    %73 = tpu.matmul %70, %72, %cst_26 {dimension_numbers = #tpu.dot_dimension_numbers<[1], [0], [0], [1], [0, 0, 1, 1], [], []>} : vector<8x128xbf16>, vector<128x256xbf16>, vector<8x256xf32> -> vector<8x256xf32>
    %74 = arith.addf %64, %73 : vector<8x256xf32>
    %75 = vector.extract_strided_slice %3 {offsets = [0, 7], sizes = [8, 1], strides = [1, 1]} : vector<8x8xi32> to vector<8x1xi32>
    %76 = vector.broadcast %75 : vector<8x1xi32> to vector<8x128xi32>
    %77 = arith.cmpi eq, %76, %4 : vector<8x128xi32>
    %78 = arith.extui %77 : vector<8x128xi1> to vector<8x128xi32>
    %79 = arith.sitofp %78 : vector<8x128xi32> to vector<8x128xf32>
    %80 = arith.truncf %79 : vector<8x128xf32> to vector<8x128xbf16>
    %c7 = arith.constant 7 : index
    %c0_27 = arith.constant 0 : index
    %c0_28 = arith.constant 0 : index
    %81 = vector.load %arg5[%c7, %c0_27, %c0_28] : memref<8x128x256xbf16, #tpu.memory_space<vmem>>, vector<1x128x256xbf16>
    %82 = vector.shape_cast %81 : vector<1x128x256xbf16> to vector<128x256xbf16>
    %cst_29 = arith.constant dense<0.000000e+00> : vector<8x256xf32>
    %83 = tpu.matmul %80, %82, %cst_29 {dimension_numbers = #tpu.dot_dimension_numbers<[1], [0], [0], [1], [0, 0, 1, 1], [], []>} : vector<8x128xbf16>, vector<128x256xbf16>, vector<8x256xf32> -> vector<8x256xf32>
    %84 = arith.addf %74, %83 : vector<8x256xf32>
    %c0_30 = arith.constant 0 : index
    %c0_31 = arith.constant 0 : index
    %85 = vector.load %arg4[%c0_30, %c0_31] : memref<1x256xf32, #tpu.memory_space<vmem>>, vector<1x256xf32>
    %86 = vector.broadcast %85 : vector<1x256xf32> to vector<8x256xf32>
    %87 = arith.addf %84, %86 : vector<8x256xf32>
    %cst_32 = arith.constant 0.000000e+00 : f32
    %88 = vector.broadcast %cst_32 : f32 to vector<8x256xf32>
    %89 = arith.maximumf %87, %88 : vector<8x256xf32>
    %90 = arith.truncf %89 : vector<8x256xf32> to vector<8x256xbf16>
    %c0_33 = arith.constant 0 : index
    %c0_34 = arith.constant 0 : index
    %91 = vector.load %arg6[%c0_33, %c0_34] : memref<256x128xbf16, #tpu.memory_space<vmem>>, vector<256x128xbf16>
    %cst_35 = arith.constant dense<0.000000e+00> : vector<8x128xf32>
    %92 = tpu.matmul %90, %91, %cst_35 {dimension_numbers = #tpu.dot_dimension_numbers<[1], [0], [0], [1], [0, 0, 1, 1], [], []>} : vector<8x256xbf16>, vector<256x128xbf16>, vector<8x128xf32> -> vector<8x128xf32>
    %c0_36 = arith.constant 0 : index
    %c0_37 = arith.constant 0 : index
    %93 = vector.load %arg7[%c0_36, %c0_37] : memref<1x128xf32, #tpu.memory_space<vmem>>, vector<1x128xf32>
    %94 = vector.broadcast %93 : vector<1x128xf32> to vector<8x128xf32>
    %95 = arith.addf %92, %94 : vector<8x128xf32>
    %cst_38 = arith.constant 0.000000e+00 : f32
    %96 = vector.broadcast %cst_38 : f32 to vector<8x128xf32>
    %97 = arith.maximumf %95, %96 : vector<8x128xf32>
    %c0_39 = arith.constant 0 : index
    %c0_40 = arith.constant 0 : index
    %98 = vector.load %arg8[%c0_39, %c0_40] : memref<1x128xf32, #tpu.memory_space<vmem>>, vector<1x128xf32>
    %99 = vector.broadcast %98 : vector<1x128xf32> to vector<8x128xf32>
    %100 = arith.mulf %97, %99 : vector<8x128xf32>
    %cst_41 = arith.constant dense<0.000000e+00> : vector<8xf32>
    %101 = vector.multi_reduction <add>, %100, %cst_41 [1] : vector<8x128xf32> to vector<8xf32>
    %102 = vector.shape_cast %101 : vector<8xf32> to vector<8x1xf32>
    %c0_42 = arith.constant 0 : index
    %103 = memref.load %arg9[%c0_42] : memref<1xf32, #tpu.memory_space<smem>>
    %104 = vector.broadcast %103 : f32 to vector<8x1xf32>
    %105 = arith.addf %102, %104 : vector<8x1xf32>
    %106 = vector.shape_cast %105 : vector<8x1xf32> to vector<8x1xf32>
    %107 = vector.broadcast %106 : vector<8x1xf32> to vector<8x128xf32>
    %c0_43 = arith.constant 0 : index
    %c0_44 = arith.constant 0 : index
    %108 = vector.load %arg10[%c0_43, %c0_44] : memref<8x128xf32, #tpu.memory_space<vmem>>, vector<8x128xf32>
    tpu.vector_store %arg10[%c0_43, %c0_44], %107 {strides = array<i32>} : memref<8x128xf32, #tpu.memory_space<vmem>>, vector<8x128xf32>,
    return
  }
  func.func @transform_0(%arg0: i32) -> (i32, i32) {
    %c0_i32 = arith.constant 0 : i32
    %c0_i32_0 = arith.constant 0 : i32
    return %arg0, %c0_i32 : i32, i32
  }
  func.func @transform_1(%arg0: i32) -> (i32, i32) {
    %c0_i32 = arith.constant 0 : i32
    %c0_i32_0 = arith.constant 0 : i32
    return %arg0, %c0_i32 : i32, i32
  }
  func.func @transform_2(%arg0: i32) -> (i32, i32) {
    %c0_i32 = arith.constant 0 : i32
    %c0_i32_0 = arith.constant 0 : i32
    %c0_i32_1 = arith.constant 0 : i32
    return %c0_i32, %c0_i32_0 : i32, i32
  }
  func.func @transform_3(%arg0: i32) -> (i32, i32) {
    %c0_i32 = arith.constant 0 : i32
    %c0_i32_0 = arith.constant 0 : i32
    %c0_i32_1 = arith.constant 0 : i32
    return %c0_i32, %c0_i32_0 : i32, i32
  }
  func.func @transform_4(%arg0: i32) -> (i32, i32, i32) {
    %c0_i32 = arith.constant 0 : i32
    %c0_i32_0 = arith.constant 0 : i32
    %c0_i32_1 = arith.constant 0 : i32
    %c0_i32_2 = arith.constant 0 : i32
    return %c0_i32, %c0_i32_0, %c0_i32_1 : i32, i32, i32
  }
  func.func @transform_5(%arg0: i32) -> (i32, i32) {
    %c0_i32 = arith.constant 0 : i32
    %c0_i32_0 = arith.constant 0 : i32
    %c0_i32_1 = arith.constant 0 : i32
    return %c0_i32, %c0_i32_0 : i32, i32
  }
  func.func @transform_6(%arg0: i32) -> (i32, i32) {
    %c0_i32 = arith.constant 0 : i32
    %c0_i32_0 = arith.constant 0 : i32
    %c0_i32_1 = arith.constant 0 : i32
    return %c0_i32, %c0_i32_0 : i32, i32
  }
  func.func @transform_7(%arg0: i32) -> (i32, i32) {
    %c0_i32 = arith.constant 0 : i32
    %c0_i32_0 = arith.constant 0 : i32
    %c0_i32_1 = arith.constant 0 : i32
    return %c0_i32, %c0_i32_0 : i32, i32
  }
  func.func @transform_8(%arg0: i32) -> i32 {
    %c0_i32 = arith.constant 0 : i32
    %c0_i32_0 = arith.constant 0 : i32
    return %c0_i32 : i32
  }
  func.func @transform_9(%arg0: i32) -> (i32, i32) {
    %c0_i32 = arith.constant 0 : i32
    %c0_i32_0 = arith.constant 0 : i32
    return %arg0, %c0_i32 : i32, i32
  }
}

</mosaic_0001>

<llo_original>
// kernel: tpu_custom_call.1
$region0: #{tpu_custom_call.1}
  #allocation0 [shape = 'u32[]', space=smem, size = 0x4, offset = 0x4, fixed_abs, tag = 'smem constant byte address 0x4 - core index']
  #allocation1 [shape = 'u32[144,128]{1,0:T(1,128)}', space=vmem, size = 0x12000, scoped, tag = 'internal scratch']
  #allocation2 [shape = 'f32[1]{0:T(128)S(6)}', space=smem, size = 0x200, scoped, tag = 'scoped memory for tpu_custom_call.1']
  %s0 = inlined_call_operand.hbm [shape: s32[8,8], index: 0, kind: input, shape index: {}]
  %s1 = inlined_call_operand.hbm [shape: bf16[8,128], index: 1, kind: input, shape index: {}]
  %s2 = inlined_call_operand.hbm [shape: bf16[128,256], index: 2, kind: input, shape index: {}]
  %s3 = inlined_call_operand.vmem [shape: f32[1,256], index: 3, kind: input, shape index: {}]
  %s4 = inlined_call_operand.hbm [shape: bf16[8,128,256], index: 4, kind: input, shape index: {}]
  %s5 = inlined_call_operand.hbm [shape: bf16[256,128], index: 5, kind: input, shape index: {}]
  %s6 = inlined_call_operand.vmem [shape: f32[1,128], index: 6, kind: input, shape index: {}]
  %s7 = inlined_call_operand.vmem [shape: f32[1,128], index: 7, kind: input, shape index: {}]
  %s8 = inlined_call_operand.<no memory space> [shape: f32[1], index: 8, kind: input, shape index: {}]
  %s9 = inlined_call_operand.hbm [shape: f32[8,128], index: 9, kind: output, shape index: {}]
  %s10 = sld [smem:[#allocation0]]
  $region66: #{tpu_custom_call.1} parent=0
    _
  %s12 = ssub.s32 1, %s10
  %s13 = scalar_select 0, %s12, %s10
  %14 = sst [smem:[#allocation2]] %s8
  $region1: #{tpu_custom_call.1} parent=0
    #allocation3 [shape = 'u8[4096]{0}', space=vmem, size = 0x1000, scoped, tag = 'input window, operand 0, single buffered']
    #allocation4 [shape = 's32[1]{0}', space=sflag, size = 0x4, scoped, tag = 'scoped memory for tpu_custom_call.1']
    #allocation5 [shape = 's32[1]{0}', space=sflag, size = 0x4, scoped, tag = 'scoped memory for tpu_custom_call.1']
    #allocation6 [shape = 'u8[2048]{0}', space=vmem, size = 0x800, scoped, tag = 'input window, operand 1, single buffered']
    #allocation7 [shape = 's32[1]{0}', space=sflag, size = 0x4, scoped, tag = 'scoped memory for tpu_custom_call.1']
    #allocation8 [shape = 'u8[65536]{0}', space=vmem, size = 0x10000, scoped, tag = 'input window, operand 2, single buffered']
    #allocation9 [shape = 'u8[524288]{0}', space=vmem, size = 0x80000, scoped, tag = 'input window, operand 4, single buffered']
    #allocation10 [shape = 's32[1]{0}', space=sflag, size = 0x4, scoped, tag = 'scoped memory for tpu_custom_call.1']
    #allocation11 [shape = 'u8[65536]{0}', space=vmem, size = 0x10000, scoped, tag = 'input window, operand 5, single buffered']
    #allocation12 [shape = 'u8[4096]{0}', space=vmem, size = 0x1000, scoped, tag = 'output window, operand 0, single buffered']
    %15 = vsyncpa [#allocation4], 0
    %16 = vsyncpa [#allocation7], 0
    %17 = vsyncpa [#allocation10], 0
    %18 = vsyncpa [#allocation5], 0
    // Predicated region
    $region2: #{tpu_custom_call.1} parent=1 // pred_check
      _
    $region3: #{tpu_custom_call.1} parent=1 // pred_check_branch
      %20 = sbr.rel (0) target = $region5
    $region4: #{tpu_custom_call.1} parent=1 // pred_region
      %s22 = ssub.s32 128, 128
      %23 = vsyncadd [#allocation4], %s22
      %s25 = sshll.u32 [#allocation3], 4
      %s26 = int_to_ptr.vmem [resolvable:$true] %s25
      %28 = dma.hbm_to_vmem [thread:$0]  %s0, 128, %s26, [#allocation4]
    $region5: #{tpu_custom_call.1} parent=1 // pred_fallthru
      _
    // Predicated region
    $region6: #{tpu_custom_call.1} parent=1 // pred_check
      _
    $region7: #{tpu_custom_call.1} parent=1 // pred_check_branch
      %30 = sbr.rel (0) target = $region9
    $region8: #{tpu_custom_call.1} parent=1 // pred_region
      %s32 = ssub.s32 64, 64
      %33 = vsyncadd [#allocation7], %s32
      %s35 = sshll.u32 [#allocation6], 4
      %s36 = int_to_ptr.vmem [resolvable:$true] %s35
      %38 = dma.hbm_to_vmem [thread:$0]  %s1, 64, %s36, [#allocation7]
    $region9: #{tpu_custom_call.1} parent=1 // pred_fallthru
      _
    // Predicated region
    $region10: #{tpu_custom_call.1} parent=1 // pred_check
      _
    $region11: #{tpu_custom_call.1} parent=1 // pred_check_branch
      %40 = sbr.rel (0) target = $region13
    $region12: #{tpu_custom_call.1} parent=1 // pred_region
      %s42 = ssub.s32 2048, 2048
      %43 = vsyncadd [#allocation7], %s42
      %s44 = sshll.u32 [#allocation8], 4
      %s45 = int_to_ptr.vmem [resolvable:$true] %s44
      %50 = dma.hbm_to_vmem [thread:$0]  %s2, 2048, %s45, [#allocation7], 128, 128, 8
    $region13: #{tpu_custom_call.1} parent=1 // pred_fallthru
      _
    // Predicated region
    $region14: #{tpu_custom_call.1} parent=1 // pred_check
      _
    $region15: #{tpu_custom_call.1} parent=1 // pred_check_branch
      %52 = sbr.rel (0) target = $region17
    $region16: #{tpu_custom_call.1} parent=1 // pred_region
      _
    $region17: #{tpu_custom_call.1} parent=1 // pred_fallthru
      _
    // Predicated region
    $region18: #{tpu_custom_call.1} parent=1 // pred_check
      _
    $region19: #{tpu_custom_call.1} parent=1 // pred_check_branch
      %54 = sbr.rel (0) target = $region21
    $region20: #{tpu_custom_call.1} parent=1 // pred_region
      %s56 = ssub.s32 16384, 16384
      %57 = vsyncadd [#allocation10], %s56
      %s58 = sshll.u32 [#allocation9], 4
      %s59 = int_to_ptr.vmem [resolvable:$true] %s58
      %64 = dma.hbm_to_vmem [thread:$0]  %s4, 16384, %s59, [#allocation10], 128, 128, 8
    $region21: #{tpu_custom_call.1} parent=1 // pred_fallthru
      _
    // Predicated region
    $region22: #{tpu_custom_call.1} parent=1 // pred_check
      _
    $region23: #{tpu_custom_call.1} parent=1 // pred_check_branch
      %66 = sbr.rel (0) target = $region25
    $region24: #{tpu_custom_call.1} parent=1 // pred_region
      %s68 = ssub.s32 2048, 2048
      %69 = vsyncadd [#allocation10], %s68
      %s70 = sshll.u32 [#allocation11], 4
      %s71 = int_to_ptr.vmem [resolvable:$true] %s70
      %76 = dma.hbm_to_vmem [thread:$0]  %s5, 2048, %s71, [#allocation10], 64, 64, 4
    $region25: #{tpu_custom_call.1} parent=1 // pred_fallthru
      _
    // Predicated region
    $region26: #{tpu_custom_call.1} parent=1 // pred_check
      _
    $region27: #{tpu_custom_call.1} parent=1 // pred_check_branch
      %78 = sbr.rel (0) target = $region29
    $region28: #{tpu_custom_call.1} parent=1 // pred_region
      _
    $region29: #{tpu_custom_call.1} parent=1 // pred_fallthru
      _
    // Predicated region
    $region30: #{tpu_custom_call.1} parent=1 // pred_check
      _
    $region31: #{tpu_custom_call.1} parent=1 // pred_check_branch
      %80 = sbr.rel (0) target = $region33
    $region32: #{tpu_custom_call.1} parent=1 // pred_region
      _
    $region33: #{tpu_custom_call.1} parent=1 // pred_fallthru
      _
    // Predicated region
    $region34: #{tpu_custom_call.1} parent=1 // pred_check
      _
    $region35: #{tpu_custom_call.1} parent=1 // pred_check_branch
      %82 = sbr.rel (0) target = $region37
    $region36: #{tpu_custom_call.1} parent=1 // pred_region
      _
    $region37: #{tpu_custom_call.1} parent=1 // pred_fallthru
      _
    // Predicated region
    $region38: #{tpu_custom_call.1} parent=1 // pred_check
      _
    $region39: #{tpu_custom_call.1} parent=1 // pred_check_branch
      %84 = sbr.rel (0) target = $region41
    $region40: #{tpu_custom_call.1} parent=1 // pred_region
      %85 = dma.done [#allocation4], 128
    $region41: #{tpu_custom_call.1} parent=1 // pred_fallthru
      _
    // Predicated region
    $region42: #{tpu_custom_call.1} parent=1 // pred_check
      _
    $region43: #{tpu_custom_call.1} parent=1 // pred_check_branch
      %87 = sbr.rel (0) target = $region45
    $region44: #{tpu_custom_call.1} parent=1 // pred_region
      %88 = dma.done [#allocation7], 64
    $region45: #{tpu_custom_call.1} parent=1 // pred_fallthru
      _
    // Predicated region
    $region46: #{tpu_custom_call.1} parent=1 // pred_check
      _
    $region47: #{tpu_custom_call.1} parent=1 // pred_check_branch
      %90 = sbr.rel (0) target = $region49
    $region48: #{tpu_custom_call.1} parent=1 // pred_region
      %91 = dma.done [#allocation7], 2048
    $region49: #{tpu_custom_call.1} parent=1 // pred_fallthru
      _
    // Predicated region
    $region50: #{tpu_custom_call.1} parent=1 // pred_check
      _
    $region51: #{tpu_custom_call.1} parent=1 // pred_check_branch
      %93 = sbr.rel (0) target = $region53
    $region52: #{tpu_custom_call.1} parent=1 // pred_region
      %94 = dma.done [#allocation10], 16384
    $region53: #{tpu_custom_call.1} parent=1 // pred_fallthru
      _
    // Predicated region
    $region54: #{tpu_custom_call.1} parent=1 // pred_check
      _
    $region55: #{tpu_custom_call.1} parent=1 // pred_check_branch
      %96 = sbr.rel (0) target = $region57
    $region56: #{tpu_custom_call.1} parent=1 // pred_region
      %97 = dma.done [#allocation10], 2048
    $region57: #{tpu_custom_call.1} parent=1 // pred_fallthru
      _
    %v99 = vld [vmem:[#allocation6] sm:$0xf]
    %v100 = vld [vmem:[#allocation8] sm:$0xff]
    %v101 = vld [vmem:[#allocation8 + $0x8] sm:$0xff]
    %v102 = vld [vmem:[#allocation8 + $0x10] sm:$0xff]
    %v103 = vld [vmem:[#allocation8 + $0x18] sm:$0xff]
    %v104 = vld [vmem:[#allocation8 + $0x20] sm:$0xff]
    %v105 = vld [vmem:[#allocation8 + $0x28] sm:$0xff]
    %v106 = vld [vmem:[#allocation8 + $0x30] sm:$0xff]
    %v107 = vld [vmem:[#allocation8 + $0x38] sm:$0xff]
    %v108 = vld [vmem:[#allocation8 + $0x40] sm:$0xff]
    %v109 = vld [vmem:[#allocation8 + $0x48] sm:$0xff]
    %v110 = vld [vmem:[#allocation8 + $0x50] sm:$0xff]
    %v111 = vld [vmem:[#allocation8 + $0x58] sm:$0xff]
    %v112 = vld [vmem:[#allocation8 + $0x60] sm:$0xff]
    %v113 = vld [vmem:[#allocation8 + $0x68] sm:$0xff]
    %v114 = vld [vmem:[#allocation8 + $0x70] sm:$0xff]
    %v115 = vld [vmem:[#allocation8 + $0x78] sm:$0xff]
    %v116 = vld [vmem:[#allocation3] sm:$0xff]
    %v117 = vlaneseq
    %v118 = vand.u32 %v117, 127
    %119 = vset.pattern.permute.xlu0 0
    %120 = vperm.xlu0 %119, %v116
    %v121 = vpop.permute.xlu0 %120
    %vm122 = vcmp.eq.s32.totalorder %v121, %v118
    %v123 = vsel %vm122, 1, 0
    %v124 = vcvt.s32.f32 %v123
    %v125 = vpack.c.bf16 %v124, %v124
    %v126 = vld [vmem:[#allocation9] sm:$0xff]
    %v127 = vld [vmem:[#allocation9 + $0x8] sm:$0xff]
    %v128 = vld [vmem:[#allocation9 + $0x10] sm:$0xff]
    %v129 = vld [vmem:[#allocation9 + $0x18] sm:$0xff]
    %v130 = vld [vmem:[#allocation9 + $0x20] sm:$0xff]
    %v131 = vld [vmem:[#allocation9 + $0x28] sm:$0xff]
    %v132 = vld [vmem:[#allocation9 + $0x30] sm:$0xff]
    %v133 = vld [vmem:[#allocation9 + $0x38] sm:$0xff]
    %v134 = vld [vmem:[#allocation9 + $0x40] sm:$0xff]
    %v135 = vld [vmem:[#allocation9 + $0x48] sm:$0xff]
    %v136 = vld [vmem:[#allocation9 + $0x50] sm:$0xff]
    %v137 = vld [vmem:[#allocation9 + $0x58] sm:$0xff]
    %v138 = vld [vmem:[#allocation9 + $0x60] sm:$0xff]
    %v139 = vld [vmem:[#allocation9 + $0x68] sm:$0xff]
    %v140 = vld [vmem:[#allocation9 + $0x70] sm:$0xff]
    %v141 = vld [vmem:[#allocation9 + $0x78] sm:$0xff]
    %v158 = vunpack.c.l.b16 %v126
    %v159 = vunpack.c.h.b16 %v126
    %v160 = vunpack.c.l.b16 %v127
    %v161 = vunpack.c.h.b16 %v127
    %v162 = vunpack.c.l.b16 %v128
    %v163 = vunpack.c.h.b16 %v128
    %v164 = vunpack.c.l.b16 %v129
    %v165 = vunpack.c.h.b16 %v129
    %v166 = vunpack.c.l.b16 %v130
    %v167 = vunpack.c.h.b16 %v130
    %v168 = vunpack.c.l.b16 %v131
    %v169 = vunpack.c.h.b16 %v131
    %v170 = vunpack.c.l.b16 %v132
    %v171 = vunpack.c.h.b16 %v132
    %v172 = vunpack.c.l.b16 %v133
    %v173 = vunpack.c.h.b16 %v133
    %v174 = vunpack.c.l.b16 %v134
    %v175 = vunpack.c.h.b16 %v134
    %v176 = vunpack.c.l.b16 %v135
    %v177 = vunpack.c.h.b16 %v135
    %v178 = vunpack.c.l.b16 %v136
    %v179 = vunpack.c.h.b16 %v136
    %v180 = vunpack.c.l.b16 %v137
    %v181 = vunpack.c.h.b16 %v137
    %v182 = vunpack.c.l.b16 %v138
    %v183 = vunpack.c.h.b16 %v138
    %v184 = vunpack.c.l.b16 %v139
    %v185 = vunpack.c.h.b16 %v139
    %v186 = vunpack.c.l.b16 %v140
    %v187 = vunpack.c.h.b16 %v140
    %v188 = vunpack.c.l.b16 %v141
    %v189 = vunpack.c.h.b16 %v141
    %v190 = vpack.c.b16 %v160, %v158
    %v191 = vpack.c.b16 %v161, %v159
    %v192 = vpack.c.b16 %v164, %v162
    %v193 = vpack.c.b16 %v165, %v163
    %v194 = vpack.c.b16 %v168, %v166
    %v195 = vpack.c.b16 %v169, %v167
    %v196 = vpack.c.b16 %v172, %v170
    %v197 = vpack.c.b16 %v173, %v171
    %v198 = vpack.c.b16 %v176, %v174
    %v199 = vpack.c.b16 %v177, %v175
    %v200 = vpack.c.b16 %v180, %v178
    %v201 = vpack.c.b16 %v181, %v179
    %v202 = vpack.c.b16 %v184, %v182
    %v203 = vpack.c.b16 %v185, %v183
    %v204 = vpack.c.b16 %v188, %v186
    %v205 = vpack.c.b16 %v189, %v187
    %222 = vmatprep.subr.bf16.mxu0 %v205
    %223 = vmatpush1.bf16.msra.mxu0 %v204
    %224 = vmatprep.subr.bf16.mxu0 %v203
    %225 = vmatpush1.bf16.msra.mxu0 %v202
    %226 = vmatprep.subr.bf16.mxu0 %v201
    %227 = vmatpush1.bf16.msra.mxu0 %v200
    %228 = vmatprep.subr.bf16.mxu0 %v199
    %229 = vmatpush1.bf16.msra.mxu0 %v198
    %230 = vmatprep.subr.bf16.mxu0 %v197
    %231 = vmatpush1.bf16.msra.mxu0 %v196
    %232 = vmatprep.subr.bf16.mxu0 %v195
    %233 = vmatpush1.bf16.msra.mxu0 %v194
    %234 = vmatprep.subr.bf16.mxu0 %v193
    %235 = vmatpush1.bf16.msra.mxu0 %v192
    %236 = vmatprep.subr.bf16.mxu0 %v191
    %237 = vmatpush1.bf16.msra.mxu0 %v190
    %238 = vmatprep.subr.bf16.mxu0 0
    %239 = vmatpush2.bf16.msra.mxu0 0
    %240 = vmatprep.subr.bf16.mxu0 0
    %241 = vmatpush2.bf16.msra.mxu0 0
    %242 = vmatprep.subr.bf16.mxu0 0
    %243 = vmatpush2.bf16.msra.mxu0 0
    %244 = vmatprep.subr.bf16.mxu0 0
    %245 = vmatpush2.bf16.msra.mxu0 0
    %246 = vmatprep.subr.bf16.mxu0 0
    %247 = vmatpush2.bf16.msra.mxu0 0
    %248 = vmatprep.subr.bf16.mxu0 0
    %249 = vmatpush2.bf16.msra.mxu0 0
    %250 = vmatprep.subr.bf16.mxu0 0
    %251 = vmatpush2.bf16.msra.mxu0 0
    %252 = vmatprep.subr.bf16.mxu0 0
    %253 = vmatpush2.bf16.msra.mxu0 0
    %254 = vmatprep.mubr.bf16.mxu0 0
    %255 = vmatmul.mubr.bf16.gmra.mxu0 %v125
    %v256 = vpop.f32.mrf.mxu0
    %v257 = vadd.f32 0.0, %v256
    %v258 = vpop.f32.mrf.mxu0
    %v259 = vadd.f32 0.0, %v258
    %v260 = vpop.f32.mrf.mxu0
    %v261 = vpop.f32.mrf.mxu0
    %262 = vdwg.mxu0
    %v279 = vunpack.c.l.b16 %v100
    %v280 = vunpack.c.h.b16 %v100
    %v281 = vunpack.c.l.b16 %v101
    %v282 = vunpack.c.h.b16 %v101
    %v283 = vunpack.c.l.b16 %v102
    %v284 = vunpack.c.h.b16 %v102
    %v285 = vunpack.c.l.b16 %v103
    %v286 = vunpack.c.h.b16 %v103
    %v287 = vunpack.c.l.b16 %v104
    %v288 = vunpack.c.h.b16 %v104
    %v289 = vunpack.c.l.b16 %v105
    %v290 = vunpack.c.h.b16 %v105
    %v291 = vunpack.c.l.b16 %v106
    %v292 = vunpack.c.h.b16 %v106
    %v293 = vunpack.c.l.b16 %v107
    %v294 = vunpack.c.h.b16 %v107
    %v295 = vunpack.c.l.b16 %v108
    %v296 = vunpack.c.h.b16 %v108
    %v297 = vunpack.c.l.b16 %v109
    %v298 = vunpack.c.h.b16 %v109
    %v299 = vunpack.c.l.b16 %v110
    %v300 = vunpack.c.h.b16 %v110
    %v301 = vunpack.c.l.b16 %v111
    %v302 = vunpack.c.h.b16 %v111
    %v303 = vunpack.c.l.b16 %v112
    %v304 = vunpack.c.h.b16 %v112
    %v305 = vunpack.c.l.b16 %v113
    %v306 = vunpack.c.h.b16 %v113
    %v307 = vunpack.c.l.b16 %v114
    %v308 = vunpack.c.h.b16 %v114
    %v309 = vunpack.c.l.b16 %v115
    %v310 = vunpack.c.h.b16 %v115
    %v311 = vpack.c.b16 %v281, %v279
    %v312 = vpack.c.b16 %v282, %v280
    %v313 = vpack.c.b16 %v285, %v283
    %v314 = vpack.c.b16 %v286, %v284
    %v315 = vpack.c.b16 %v289, %v287
    %v316 = vpack.c.b16 %v290, %v288
    %v317 = vpack.c.b16 %v293, %v291
    %v318 = vpack.c.b16 %v294, %v292
    %v319 = vpack.c.b16 %v297, %v295
    %v320 = vpack.c.b16 %v298, %v296
    %v321 = vpack.c.b16 %v301, %v299
    %v322 = vpack.c.b16 %v302, %v300
    %v323 = vpack.c.b16 %v305, %v303
    %v324 = vpack.c.b16 %v306, %v304
    %v325 = vpack.c.b16 %v309, %v307
    %v326 = vpack.c.b16 %v310, %v308
    %343 = vmatprep.subr.bf16.mxu0 %v326
    %344 = vmatpush1.bf16.msra.mxu0 %v325
    %345 = vmatprep.subr.bf16.mxu0 %v324
    %346 = vmatpush1.bf16.msra.mxu0 %v323
    %347 = vmatprep.subr.bf16.mxu0 %v322
    %348 = vmatpush1.bf16.msra.mxu0 %v321
    %349 = vmatprep.subr.bf16.mxu0 %v320
    %350 = vmatpush1.bf16.msra.mxu0 %v319
    %351 = vmatprep.subr.bf16.mxu0 %v318
    %352 = vmatpush1.bf16.msra.mxu0 %v317
    %353 = vmatprep.subr.bf16.mxu0 %v316
    %354 = vmatpush1.bf16.msra.mxu0 %v315
    %355 = vmatprep.subr.bf16.mxu0 %v314
    %356 = vmatpush1.bf16.msra.mxu0 %v313
    %357 = vmatprep.subr.bf16.mxu0 %v312
    %358 = vmatpush1.bf16.msra.mxu0 %v311
    %359 = vmatprep.subr.bf16.mxu0 0
    %360 = vmatpush2.bf16.msra.mxu0 0
    %361 = vmatprep.subr.bf16.mxu0 0
    %362 = vmatpush2.bf16.msra.mxu0 0
    %363 = vmatprep.subr.bf16.mxu0 0
    %364 = vmatpush2.bf16.msra.mxu0 0
    %365 = vmatprep.subr.bf16.mxu0 0
    %366 = vmatpush2.bf16.msra.mxu0 0
    %367 = vmatprep.subr.bf16.mxu0 0
    %368 = vmatpush2.bf16.msra.mxu0 0
    %369 = vmatprep.subr.bf16.mxu0 0
    %370 = vmatpush2.bf16.msra.mxu0 0
    %371 = vmatprep.subr.bf16.mxu0 0
    %372 = vmatpush2.bf16.msra.mxu0 0
    %373 = vmatprep.subr.bf16.mxu0 0
    %374 = vmatpush2.bf16.msra.mxu0 0
    %375 = vmatprep.mubr.bf16.mxu0 0
    %376 = vmatmul.mubr.bf16.gmra.mxu0 %v99
    %v377 = vpop.f32.mrf.mxu0
    %v378 = vadd.f32 %v257, %v377
    %v379 = vpop.f32.mrf.mxu0
    %v380 = vadd.f32 %v259, %v379
    %v381 = vpop.f32.mrf.mxu0
    %v382 = vpop.f32.mrf.mxu0
    %383 = vdwg.mxu0
    %384 = vset.pattern.permute.xlu0 1
    %385 = vperm.xlu0 %384, %v116
    %v386 = vpop.permute.xlu0 %385
    %vm387 = vcmp.eq.s32.totalorder %v386, %v118
    %v388 = vsel %vm387, 1, 0
    %v389 = vcvt.s32.f32 %v388
    %v390 = vpack.c.bf16 %v389, %v389
    %s391 = scalar_lea.vmem [#allocation9], 128
    %v392 = vld [vmem:[%s391] sm:$0xff]
    %v393 = vld [vmem:[%s391 + $0x8] sm:$0xff]
    %v394 = vld [vmem:[%s391 + $0x10] sm:$0xff]
    %v395 = vld [vmem:[%s391 + $0x18] sm:$0xff]
    %v396 = vld [vmem:[%s391 + $0x20] sm:$0xff]
    %v397 = vld [vmem:[%s391 + $0x28] sm:$0xff]
    %v398 = vld [vmem:[%s391 + $0x30] sm:$0xff]
    %v399 = vld [vmem:[%s391 + $0x38] sm:$0xff]
    %v400 = vld [vmem:[%s391 + $0x40] sm:$0xff]
    %v401 = vld [vmem:[%s391 + $0x48] sm:$0xff]
    %v402 = vld [vmem:[%s391 + $0x50] sm:$0xff]
    %v403 = vld [vmem:[%s391 + $0x58] sm:$0xff]
    %v404 = vld [vmem:[%s391 + $0x60] sm:$0xff]
    %v405 = vld [vmem:[%s391 + $0x68] sm:$0xff]
    %v406 = vld [vmem:[%s391 + $0x70] sm:$0xff]
    %v407 = vld [vmem:[%s391 + $0x78] sm:$0xff]
    %v424 = vunpack.c.l.b16 %v392
    %v425 = vunpack.c.h.b16 %v392
    %v426 = vunpack.c.l.b16 %v393
    %v427 = vunpack.c.h.b16 %v393
    %v428 = vunpack.c.l.b16 %v394
    %v429 = vunpack.c.h.b16 %v394
    %v430 = vunpack.c.l.b16 %v395
    %v431 = vunpack.c.h.b16 %v395
    %v432 = vunpack.c.l.b16 %v396
    %v433 = vunpack.c.h.b16 %v396
    %v434 = vunpack.c.l.b16 %v397
    %v435 = vunpack.c.h.b16 %v397
    %v436 = vunpack.c.l.b16 %v398
    %v437 = vunpack.c.h.b16 %v398
    %v438 = vunpack.c.l.b16 %v399
    %v439 = vunpack.c.h.b16 %v399
    %v440 = vunpack.c.l.b16 %v400
    %v441 = vunpack.c.h.b16 %v400
    %v442 = vunpack.c.l.b16 %v401
    %v443 = vunpack.c.h.b16 %v401
    %v444 = vunpack.c.l.b16 %v402
    %v445 = vunpack.c.h.b16 %v402
    %v446 = vunpack.c.l.b16 %v403
    %v447 = vunpack.c.h.b16 %v403
    %v448 = vunpack.c.l.b16 %v404
    %v449 = vunpack.c.h.b16 %v404
    %v450 = vunpack.c.l.b16 %v405
    %v451 = vunpack.c.h.b16 %v405
    %v452 = vunpack.c.l.b16 %v406
    %v453 = vunpack.c.h.b16 %v406
    %v454 = vunpack.c.l.b16 %v407
    %v455 = vunpack.c.h.b16 %v407
    %v456 = vpack.c.b16 %v426, %v424
    %v457 = vpack.c.b16 %v427, %v425
    %v458 = vpack.c.b16 %v430, %v428
    %v459 = vpack.c.b16 %v431, %v429
    %v460 = vpack.c.b16 %v434, %v432
    %v461 = vpack.c.b16 %v435, %v433
    %v462 = vpack.c.b16 %v438, %v436
    %v463 = vpack.c.b16 %v439, %v437
    %v464 = vpack.c.b16 %v442, %v440
    %v465 = vpack.c.b16 %v443, %v441
    %v466 = vpack.c.b16 %v446, %v444
    %v467 = vpack.c.b16 %v447, %v445
    %v468 = vpack.c.b16 %v450, %v448
    %v469 = vpack.c.b16 %v451, %v449
    %v470 = vpack.c.b16 %v454, %v452
    %v471 = vpack.c.b16 %v455, %v453
    %488 = vmatprep.subr.bf16.mxu0 %v471
    %489 = vmatpush1.bf16.msra.mxu0 %v470
    %490 = vmatprep.subr.bf16.mxu0 %v469
    %491 = vmatpush1.bf16.msra.mxu0 %v468
    %492 = vmatprep.subr.bf16.mxu0 %v467
    %493 = vmatpush1.bf16.msra.mxu0 %v466
    %494 = vmatprep.subr.bf16.mxu0 %v465
    %495 = vmatpush1.bf16.msra.mxu0 %v464
    %496 = vmatprep.subr.bf16.mxu0 %v463
    %497 = vmatpush1.bf16.msra.mxu0 %v462
    %498 = vmatprep.subr.bf16.mxu0 %v461
    %499 = vmatpush1.bf16.msra.mxu0 %v460
    %500 = vmatprep.subr.bf16.mxu0 %v459
    %501 = vmatpush1.bf16.msra.mxu0 %v458
    %502 = vmatprep.subr.bf16.mxu0 %v457
    %503 = vmatpush1.bf16.msra.mxu0 %v456
    %504 = vmatprep.subr.bf16.mxu0 0
    %505 = vmatpush2.bf16.msra.mxu0 0
    %506 = vmatprep.subr.bf16.mxu0 0
    %507 = vmatpush2.bf16.msra.mxu0 0
    %508 = vmatprep.subr.bf16.mxu0 0
    %509 = vmatpush2.bf16.msra.mxu0 0
    %510 = vmatprep.subr.bf16.mxu0 0
    %511 = vmatpush2.bf16.msra.mxu0 0
    %512 = vmatprep.subr.bf16.mxu0 0
    %513 = vmatpush2.bf16.msra.mxu0 0
    %514 = vmatprep.subr.bf16.mxu0 0
    %515 = vmatpush2.bf16.msra.mxu0 0
    %516 = vmatprep.subr.bf16.mxu0 0
    %517 = vmatpush2.bf16.msra.mxu0 0
    %518 = vmatprep.subr.bf16.mxu0 0
    %519 = vmatpush2.bf16.msra.mxu0 0
    %520 = vmatprep.mubr.bf16.mxu0 0
    %521 = vmatmul.mubr.bf16.gmra.mxu0 %v390
    %v522 = vpop.f32.mrf.mxu0
    %v523 = vadd.f32 0.0, %v522
    %v524 = vpop.f32.mrf.mxu0
    %v525 = vadd.f32 0.0, %v524
    %v526 = vpop.f32.mrf.mxu0
    %v527 = vpop.f32.mrf.mxu0
    %528 = vdwg.mxu0
    %v529 = vadd.f32 %v378, %v523
    %v530 = vadd.f32 %v380, %v525
    %531 = vset.pattern.permute.xlu0 2
    %532 = vperm.xlu0 %531, %v116
    %v533 = vpop.permute.xlu0 %532
    %vm534 = vcmp.eq.s32.totalorder %v533, %v118
    %v535 = vsel %vm534, 1, 0
    %v536 = vcvt.s32.f32 %v535
    %v537 = vpack.c.bf16 %v536, %v536
    %s538 = scalar_lea.vmem [#allocation9], 256
    %v539 = vld [vmem:[%s538] sm:$0xff]
    %v540 = vld [vmem:[%s538 + $0x8] sm:$0xff]
    %v541 = vld [vmem:[%s538 + $0x10] sm:$0xff]
    %v542 = vld [vmem:[%s538 + $0x18] sm:$0xff]
    %v543 = vld [vmem:[%s538 + $0x20] sm:$0xff]
    %v544 = vld [vmem:[%s538 + $0x28] sm:$0xff]
    %v545 = vld [vmem:[%s538 + $0x30] sm:$0xff]
    %v546 = vld [vmem:[%s538 + $0x38] sm:$0xff]
    %v547 = vld [vmem:[%s538 + $0x40] sm:$0xff]
    %v548 = vld [vmem:[%s538 + $0x48] sm:$0xff]
    %v549 = vld [vmem:[%s538 + $0x50] sm:$0xff]
    %v550 = vld [vmem:[%s538 + $0x58] sm:$0xff]
    %v551 = vld [vmem:[%s538 + $0x60] sm:$0xff]
    %v552 = vld [vmem:[%s538 + $0x68] sm:$0xff]
    %v553 = vld [vmem:[%s538 + $0x70] sm:$0xff]
    %v554 = vld [vmem:[%s538 + $0x78] sm:$0xff]
    %v571 = vunpack.c.l.b16 %v539
    %v572 = vunpack.c.h.b16 %v539
    %v573 = vunpack.c.l.b16 %v540
    %v574 = vunpack.c.h.b16 %v540
    %v575 = vunpack.c.l.b16 %v541
    %v576 = vunpack.c.h.b16 %v541
    %v577 = vunpack.c.l.b16 %v542
    %v578 = vunpack.c.h.b16 %v542
    %v579 = vunpack.c.l.b16 %v543
    %v580 = vunpack.c.h.b16 %v543
    %v581 = vunpack.c.l.b16 %v544
    %v582 = vunpack.c.h.b16 %v544
    %v583 = vunpack.c.l.b16 %v545
    %v584 = vunpack.c.h.b16 %v545
    %v585 = vunpack.c.l.b16 %v546
    %v586 = vunpack.c.h.b16 %v546
    %v587 = vunpack.c.l.b16 %v547
    %v588 = vunpack.c.h.b16 %v547
    %v589 = vunpack.c.l.b16 %v548
    %v590 = vunpack.c.h.b16 %v548
    %v591 = vunpack.c.l.b16 %v549
    %v592 = vunpack.c.h.b16 %v549
    %v593 = vunpack.c.l.b16 %v550
    %v594 = vunpack.c.h.b16 %v550
    %v595 = vunpack.c.l.b16 %v551
    %v596 = vunpack.c.h.b16 %v551
    %v597 = vunpack.c.l.b16 %v552
    %v598 = vunpack.c.h.b16 %v552
    %v599 = vunpack.c.l.b16 %v553
    %v600 = vunpack.c.h.b16 %v553
    %v601 = vunpack.c.l.b16 %v554
    %v602 = vunpack.c.h.b16 %v554
    %v603 = vpack.c.b16 %v573, %v571
    %v604 = vpack.c.b16 %v574, %v572
    %v605 = vpack.c.b16 %v577, %v575
    %v606 = vpack.c.b16 %v578, %v576
    %v607 = vpack.c.b16 %v581, %v579
    %v608 = vpack.c.b16 %v582, %v580
    %v609 = vpack.c.b16 %v585, %v583
    %v610 = vpack.c.b16 %v586, %v584
    %v611 = vpack.c.b16 %v589, %v587
    %v612 = vpack.c.b16 %v590, %v588
    %v613 = vpack.c.b16 %v593, %v591
    %v614 = vpack.c.b16 %v594, %v592
    %v615 = vpack.c.b16 %v597, %v595
    %v616 = vpack.c.b16 %v598, %v596
    %v617 = vpack.c.b16 %v601, %v599
    %v618 = vpack.c.b16 %v602, %v600
    %635 = vmatprep.subr.bf16.mxu0 %v618
    %636 = vmatpush1.bf16.msra.mxu0 %v617
    %637 = vmatprep.subr.bf16.mxu0 %v616
    %638 = vmatpush1.bf16.msra.mxu0 %v615
    %639 = vmatprep.subr.bf16.mxu0 %v614
    %640 = vmatpush1.bf16.msra.mxu0 %v613
    %641 = vmatprep.subr.bf16.mxu0 %v612
    %642 = vmatpush1.bf16.msra.mxu0 %v611
    %643 = vmatprep.subr.bf16.mxu0 %v610
    %644 = vmatpush1.bf16.msra.mxu0 %v609
    %645 = vmatprep.subr.bf16.mxu0 %v608
    %646 = vmatpush1.bf16.msra.mxu0 %v607
    %647 = vmatprep.subr.bf16.mxu0 %v606
    %648 = vmatpush1.bf16.msra.mxu0 %v605
    %649 = vmatprep.subr.bf16.mxu0 %v604
    %650 = vmatpush1.bf16.msra.mxu0 %v603
    %651 = vmatprep.subr.bf16.mxu0 0
    %652 = vmatpush2.bf16.msra.mxu0 0
    %653 = vmatprep.subr.bf16.mxu0 0
    %654 = vmatpush2.bf16.msra.mxu0 0
    %655 = vmatprep.subr.bf16.mxu0 0
    %656 = vmatpush2.bf16.msra.mxu0 0
    %657 = vmatprep.subr.bf16.mxu0 0
    %658 = vmatpush2.bf16.msra.mxu0 0
    %659 = vmatprep.subr.bf16.mxu0 0
    %660 = vmatpush2.bf16.msra.mxu0 0
    %661 = vmatprep.subr.bf16.mxu0 0
    %662 = vmatpush2.bf16.msra.mxu0 0
    %663 = vmatprep.subr.bf16.mxu0 0
    %664 = vmatpush2.bf16.msra.mxu0 0
    %665 = vmatprep.subr.bf16.mxu0 0
    %666 = vmatpush2.bf16.msra.mxu0 0
    %667 = vmatprep.mubr.bf16.mxu0 0
    %668 = vmatmul.mubr.bf16.gmra.mxu0 %v537
    %v669 = vpop.f32.mrf.mxu0
    %v670 = vadd.f32 0.0, %v669
    %v671 = vpop.f32.mrf.mxu0
    %v672 = vadd.f32 0.0, %v671
    %v673 = vpop.f32.mrf.mxu0
    %v674 = vpop.f32.mrf.mxu0
    %675 = vdwg.mxu0
    %v676 = vadd.f32 %v529, %v670
    %v677 = vadd.f32 %v530, %v672
    %678 = vset.pattern.permute.xlu0 3
    %679 = vperm.xlu0 %678, %v116
    %v680 = vpop.permute.xlu0 %679
    %vm681 = vcmp.eq.s32.totalorder %v680, %v118
    %v682 = vsel %vm681, 1, 0
    %v683 = vcvt.s32.f32 %v682
    %v684 = vpack.c.bf16 %v683, %v683
    %s685 = scalar_lea.vmem [#allocation9], 384
    %v686 = vld [vmem:[%s685] sm:$0xff]
    %v687 = vld [vmem:[%s685 + $0x8] sm:$0xff]
    %v688 = vld [vmem:[%s685 + $0x10] sm:$0xff]
    %v689 = vld [vmem:[%s685 + $0x18] sm:$0xff]
    %v690 = vld [vmem:[%s685 + $0x20] sm:$0xff]
    %v691 = vld [vmem:[%s685 + $0x28] sm:$0xff]
    %v692 = vld [vmem:[%s685 + $0x30] sm:$0xff]
    %v693 = vld [vmem:[%s685 + $0x38] sm:$0xff]
    %v694 = vld [vmem:[%s685 + $0x40] sm:$0xff]
    %v695 = vld [vmem:[%s685 + $0x48] sm:$0xff]
    %v696 = vld [vmem:[%s685 + $0x50] sm:$0xff]
    %v697 = vld [vmem:[%s685 + $0x58] sm:$0xff]
    %v698 = vld [vmem:[%s685 + $0x60] sm:$0xff]
    %v699 = vld [vmem:[%s685 + $0x68] sm:$0xff]
    %v700 = vld [vmem:[%s685 + $0x70] sm:$0xff]
    %v701 = vld [vmem:[%s685 + $0x78] sm:$0xff]
    %v718 = vunpack.c.l.b16 %v686
    %v719 = vunpack.c.h.b16 %v686
    %v720 = vunpack.c.l.b16 %v687
    %v721 = vunpack.c.h.b16 %v687
    %v722 = vunpack.c.l.b16 %v688
    %v723 = vunpack.c.h.b16 %v688
    %v724 = vunpack.c.l.b16 %v689
    %v725 = vunpack.c.h.b16 %v689
    %v726 = vunpack.c.l.b16 %v690
    %v727 = vunpack.c.h.b16 %v690
    %v728 = vunpack.c.l.b16 %v691
    %v729 = vunpack.c.h.b16 %v691
    %v730 = vunpack.c.l.b16 %v692
    %v731 = vunpack.c.h.b16 %v692
    %v732 = vunpack.c.l.b16 %v693
    %v733 = vunpack.c.h.b16 %v693
    %v734 = vunpack.c.l.b16 %v694
    %v735 = vunpack.c.h.b16 %v694
    %v736 = vunpack.c.l.b16 %v695
    %v737 = vunpack.c.h.b16 %v695
    %v738 = vunpack.c.l.b16 %v696
    %v739 = vunpack.c.h.b16 %v696
    %v740 = vunpack.c.l.b16 %v697
    %v741 = vunpack.c.h.b16 %v697
    %v742 = vunpack.c.l.b16 %v698
    %v743 = vunpack.c.h.b16 %v698
    %v744 = vunpack.c.l.b16 %v699
    %v745 = vunpack.c.h.b16 %v699
    %v746 = vunpack.c.l.b16 %v700
    %v747 = vunpack.c.h.b16 %v700
    %v748 = vunpack.c.l.b16 %v701
    %v749 = vunpack.c.h.b16 %v701
    %v750 = vpack.c.b16 %v720, %v718
    %v751 = vpack.c.b16 %v721, %v719
    %v752 = vpack.c.b16 %v724, %v722
    %v753 = vpack.c.b16 %v725, %v723
    %v754 = vpack.c.b16 %v728, %v726
    %v755 = vpack.c.b16 %v729, %v727
    %v756 = vpack.c.b16 %v732, %v730
    %v757 = vpack.c.b16 %v733, %v731
    %v758 = vpack.c.b16 %v736, %v734
    %v759 = vpack.c.b16 %v737, %v735
    %v760 = vpack.c.b16 %v740, %v738
    %v761 = vpack.c.b16 %v741, %v739
    %v762 = vpack.c.b16 %v744, %v742
    %v763 = vpack.c.b16 %v745, %v743
    %v764 = vpack.c.b16 %v748, %v746
    %v765 = vpack.c.b16 %v749, %v747
    %782 = vmatprep.subr.bf16.mxu0 %v765
    %783 = vmatpush1.bf16.msra.mxu0 %v764
    %784 = vmatprep.subr.bf16.mxu0 %v763
    %785 = vmatpush1.bf16.msra.mxu0 %v762
    %786 = vmatprep.subr.bf16.mxu0 %v761
    %787 = vmatpush1.bf16.msra.mxu0 %v760
    %788 = vmatprep.subr.bf16.mxu0 %v759
    %789 = vmatpush1.bf16.msra.mxu0 %v758
    %790 = vmatprep.subr.bf16.mxu0 %v757
    %791 = vmatpush1.bf16.msra.mxu0 %v756
    %792 = vmatprep.subr.bf16.mxu0 %v755
    %793 = vmatpush1.bf16.msra.mxu0 %v754
    %794 = vmatprep.subr.bf16.mxu0 %v753
    %795 = vmatpush1.bf16.msra.mxu0 %v752
    %796 = vmatprep.subr.bf16.mxu0 %v751
    %797 = vmatpush1.bf16.msra.mxu0 %v750
    %798 = vmatprep.subr.bf16.mxu0 0
    %799 = vmatpush2.bf16.msra.mxu0 0
    %800 = vmatprep.subr.bf16.mxu0 0
    %801 = vmatpush2.bf16.msra.mxu0 0
    %802 = vmatprep.subr.bf16.mxu0 0
    %803 = vmatpush2.bf16.msra.mxu0 0
    %804 = vmatprep.subr.bf16.mxu0 0
    %805 = vmatpush2.bf16.msra.mxu0 0
    %806 = vmatprep.subr.bf16.mxu0 0
    %807 = vmatpush2.bf16.msra.mxu0 0
    %808 = vmatprep.subr.bf16.mxu0 0
    %809 = vmatpush2.bf16.msra.mxu0 0
    %810 = vmatprep.subr.bf16.mxu0 0
    %811 = vmatpush2.bf16.msra.mxu0 0
    %812 = vmatprep.subr.bf16.mxu0 0
    %813 = vmatpush2.bf16.msra.mxu0 0
    %814 = vmatprep.mubr.bf16.mxu0 0
    %815 = vmatmul.mubr.bf16.gmra.mxu0 %v684
    %v816 = vpop.f32.mrf.mxu0
    %v817 = vadd.f32 0.0, %v816
    %v818 = vpop.f32.mrf.mxu0
    %v819 = vadd.f32 0.0, %v818
    %v820 = vpop.f32.mrf.mxu0
    %v821 = vpop.f32.mrf.mxu0
    %822 = vdwg.mxu0
    %v823 = vadd.f32 %v676, %v817
    %v824 = vadd.f32 %v677, %v819
    %825 = vset.pattern.permute.xlu0 4
    %826 = vperm.xlu0 %825, %v116
    %v827 = vpop.permute.xlu0 %826
    %vm828 = vcmp.eq.s32.totalorder %v827, %v118
    %v829 = vsel %vm828, 1, 0
    %v830 = vcvt.s32.f32 %v829
    %v831 = vpack.c.bf16 %v830, %v830
    %s832 = scalar_lea.vmem [#allocation9], 512
    %v833 = vld [vmem:[%s832] sm:$0xff]
    %v834 = vld [vmem:[%s832 + $0x8] sm:$0xff]
    %v835 = vld [vmem:[%s832 + $0x10] sm:$0xff]
    %v836 = vld [vmem:[%s832 + $0x18] sm:$0xff]
    %v837 = vld [vmem:[%s832 + $0x20] sm:$0xff]
    %v838 = vld [vmem:[%s832 + $0x28] sm:$0xff]
    %v839 = vld [vmem:[%s832 + $0x30] sm:$0xff]
    %v840 = vld [vmem:[%s832 + $0x38] sm:$0xff]
    %v841 = vld [vmem:[%s832 + $0x40] sm:$0xff]
    %v842 = vld [vmem:[%s832 + $0x48] sm:$0xff]
    %v843 = vld [vmem:[%s832 + $0x50] sm:$0xff]
    %v844 = vld [vmem:[%s832 + $0x58] sm:$0xff]
    %v845 = vld [vmem:[%s832 + $0x60] sm:$0xff]
    %v846 = vld [vmem:[%s832 + $0x68] sm:$0xff]
    %v847 = vld [vmem:[%s832 + $0x70] sm:$0xff]
    %v848 = vld [vmem:[%s832 + $0x78] sm:$0xff]
    %v865 = vunpack.c.l.b16 %v833
    %v866 = vunpack.c.h.b16 %v833
    %v867 = vunpack.c.l.b16 %v834
    %v868 = vunpack.c.h.b16 %v834
    %v869 = vunpack.c.l.b16 %v835
    %v870 = vunpack.c.h.b16 %v835
    %v871 = vunpack.c.l.b16 %v836
    %v872 = vunpack.c.h.b16 %v836
    %v873 = vunpack.c.l.b16 %v837
    %v874 = vunpack.c.h.b16 %v837
    %v875 = vunpack.c.l.b16 %v838
    %v876 = vunpack.c.h.b16 %v838
    %v877 = vunpack.c.l.b16 %v839
    %v878 = vunpack.c.h.b16 %v839
    %v879 = vunpack.c.l.b16 %v840
    %v880 = vunpack.c.h.b16 %v840
    %v881 = vunpack.c.l.b16 %v841
    %v882 = vunpack.c.h.b16 %v841
    %v883 = vunpack.c.l.b16 %v842
    %v884 = vunpack.c.h.b16 %v842
    %v885 = vunpack.c.l.b16 %v843
    %v886 = vunpack.c.h.b16 %v843
    %v887 = vunpack.c.l.b16 %v844
    %v888 = vunpack.c.h.b16 %v844
    %v889 = vunpack.c.l.b16 %v845
    %v890 = vunpack.c.h.b16 %v845
    %v891 = vunpack.c.l.b16 %v846
    %v892 = vunpack.c.h.b16 %v846
    %v893 = vunpack.c.l.b16 %v847
    %v894 = vunpack.c.h.b16 %v847
    %v895 = vunpack.c.l.b16 %v848
    %v896 = vunpack.c.h.b16 %v848
    %v897 = vpack.c.b16 %v867, %v865
    %v898 = vpack.c.b16 %v868, %v866
    %v899 = vpack.c.b16 %v871, %v869
    %v900 = vpack.c.b16 %v872, %v870
    %v901 = vpack.c.b16 %v875, %v873
    %v902 = vpack.c.b16 %v876, %v874
    %v903 = vpack.c.b16 %v879, %v877
    %v904 = vpack.c.b16 %v880, %v878
    %v905 = vpack.c.b16 %v883, %v881
    %v906 = vpack.c.b16 %v884, %v882
    %v907 = vpack.c.b16 %v887, %v885
    %v908 = vpack.c.b16 %v888, %v886
    %v909 = vpack.c.b16 %v891, %v889
    %v910 = vpack.c.b16 %v892, %v890
    %v911 = vpack.c.b16 %v895, %v893
    %v912 = vpack.c.b16 %v896, %v894
    %929 = vmatprep.subr.bf16.mxu0 %v912
    %930 = vmatpush1.bf16.msra.mxu0 %v911
    %931 = vmatprep.subr.bf16.mxu0 %v910
    %932 = vmatpush1.bf16.msra.mxu0 %v909
    %933 = vmatprep.subr.bf16.mxu0 %v908
    %934 = vmatpush1.bf16.msra.mxu0 %v907
    %935 = vmatprep.subr.bf16.mxu0 %v906
    %936 = vmatpush1.bf16.msra.mxu0 %v905
    %937 = vmatprep.subr.bf16.mxu0 %v904
    %938 = vmatpush1.bf16.msra.mxu0 %v903
    %939 = vmatprep.subr.bf16.mxu0 %v902
    %940 = vmatpush1.bf16.msra.mxu0 %v901
    %941 = vmatprep.subr.bf16.mxu0 %v900
    %942 = vmatpush1.bf16.msra.mxu0 %v899
    %943 = vmatprep.subr.bf16.mxu0 %v898
    %944 = vmatpush1.bf16.msra.mxu0 %v897
    %945 = vmatprep.subr.bf16.mxu0 0
    %946 = vmatpush2.bf16.msra.mxu0 0
    %947 = vmatprep.subr.bf16.mxu0 0
    %948 = vmatpush2.bf16.msra.mxu0 0
    %949 = vmatprep.subr.bf16.mxu0 0
    %950 = vmatpush2.bf16.msra.mxu0 0
    %951 = vmatprep.subr.bf16.mxu0 0
    %952 = vmatpush2.bf16.msra.mxu0 0
    %953 = vmatprep.subr.bf16.mxu0 0
    %954 = vmatpush2.bf16.msra.mxu0 0
    %955 = vmatprep.subr.bf16.mxu0 0
    %956 = vmatpush2.bf16.msra.mxu0 0
    %957 = vmatprep.subr.bf16.mxu0 0
    %958 = vmatpush2.bf16.msra.mxu0 0
    %959 = vmatprep.subr.bf16.mxu0 0
    %960 = vmatpush2.bf16.msra.mxu0 0
    %961 = vmatprep.mubr.bf16.mxu0 0
    %962 = vmatmul.mubr.bf16.gmra.mxu0 %v831
    %v963 = vpop.f32.mrf.mxu0
    %v964 = vadd.f32 0.0, %v963
    %v965 = vpop.f32.mrf.mxu0
    %v966 = vadd.f32 0.0, %v965
    %v967 = vpop.f32.mrf.mxu0
    %v968 = vpop.f32.mrf.mxu0
    %969 = vdwg.mxu0
    %v970 = vadd.f32 %v823, %v964
    %v971 = vadd.f32 %v824, %v966
    %972 = vset.pattern.permute.xlu0 5
    %973 = vperm.xlu0 %972, %v116
    %v974 = vpop.permute.xlu0 %973
    %vm975 = vcmp.eq.s32.totalorder %v974, %v118
    %v976 = vsel %vm975, 1, 0
    %v977 = vcvt.s32.f32 %v976
    %v978 = vpack.c.bf16 %v977, %v977
    %s979 = scalar_lea.vmem [#allocation9], 640
    %v980 = vld [vmem:[%s979] sm:$0xff]
    %v981 = vld [vmem:[%s979 + $0x8] sm:$0xff]
    %v982 = vld [vmem:[%s979 + $0x10] sm:$0xff]
    %v983 = vld [vmem:[%s979 + $0x18] sm:$0xff]
    %v984 = vld [vmem:[%s979 + $0x20] sm:$0xff]
    %v985 = vld [vmem:[%s979 + $0x28] sm:$0xff]
    %v986 = vld [vmem:[%s979 + $0x30] sm:$0xff]
    %v987 = vld [vmem:[%s979 + $0x38] sm:$0xff]
    %v988 = vld [vmem:[%s979 + $0x40] sm:$0xff]
    %v989 = vld [vmem:[%s979 + $0x48] sm:$0xff]
    %v990 = vld [vmem:[%s979 + $0x50] sm:$0xff]
    %v991 = vld [vmem:[%s979 + $0x58] sm:$0xff]
    %v992 = vld [vmem:[%s979 + $0x60] sm:$0xff]
    %v993 = vld [vmem:[%s979 + $0x68] sm:$0xff]
    %v994 = vld [vmem:[%s979 + $0x70] sm:$0xff]
    %v995 = vld [vmem:[%s979 + $0x78] sm:$0xff]
    %v1012 = vunpack.c.l.b16 %v980
    %v1013 = vunpack.c.h.b16 %v980
    %v1014 = vunpack.c.l.b16 %v981
    %v1015 = vunpack.c.h.b16 %v981
    %v1016 = vunpack.c.l.b16 %v982
    %v1017 = vunpack.c.h.b16 %v982
    %v1018 = vunpack.c.l.b16 %v983
    %v1019 = vunpack.c.h.b16 %v983
    %v1020 = vunpack.c.l.b16 %v984
    %v1021 = vunpack.c.h.b16 %v984
    %v1022 = vunpack.c.l.b16 %v985
    %v1023 = vunpack.c.h.b16 %v985
    %v1024 = vunpack.c.l.b16 %v986
    %v1025 = vunpack.c.h.b16 %v986
    %v1026 = vunpack.c.l.b16 %v987
    %v1027 = vunpack.c.h.b16 %v987
    %v1028 = vunpack.c.l.b16 %v988
    %v1029 = vunpack.c.h.b16 %v988
    %v1030 = vunpack.c.l.b16 %v989
    %v1031 = vunpack.c.h.b16 %v989
    %v1032 = vunpack.c.l.b16 %v990
    %v1033 = vunpack.c.h.b16 %v990
    %v1034 = vunpack.c.l.b16 %v991
    %v1035 = vunpack.c.h.b16 %v991
    %v1036 = vunpack.c.l.b16 %v992
    %v1037 = vunpack.c.h.b16 %v992
    %v1038 = vunpack.c.l.b16 %v993
    %v1039 = vunpack.c.h.b16 %v993
    %v1040 = vunpack.c.l.b16 %v994
    %v1041 = vunpack.c.h.b16 %v994
    %v1042 = vunpack.c.l.b16 %v995
    %v1043 = vunpack.c.h.b16 %v995
    %v1044 = vpack.c.b16 %v1014, %v1012
    %v1045 = vpack.c.b16 %v1015, %v1013
    %v1046 = vpack.c.b16 %v1018, %v1016
    %v1047 = vpack.c.b16 %v1019, %v1017
    %v1048 = vpack.c.b16 %v1022, %v1020
    %v1049 = vpack.c.b16 %v1023, %v1021
    %v1050 = vpack.c.b16 %v1026, %v1024
    %v1051 = vpack.c.b16 %v1027, %v1025
    %v1052 = vpack.c.b16 %v1030, %v1028
    %v1053 = vpack.c.b16 %v1031, %v1029
    %v1054 = vpack.c.b16 %v1034, %v1032
    %v1055 = vpack.c.b16 %v1035, %v1033
    %v1056 = vpack.c.b16 %v1038, %v1036
    %v1057 = vpack.c.b16 %v1039, %v1037
    %v1058 = vpack.c.b16 %v1042, %v1040
    %v1059 = vpack.c.b16 %v1043, %v1041
    %1076 = vmatprep.subr.bf16.mxu0 %v1059
    %1077 = vmatpush1.bf16.msra.mxu0 %v1058
    %1078 = vmatprep.subr.bf16.mxu0 %v1057
    %1079 = vmatpush1.bf16.msra.mxu0 %v1056
    %1080 = vmatprep.subr.bf16.mxu0 %v1055
    %1081 = vmatpush1.bf16.msra.mxu0 %v1054
    %1082 = vmatprep.subr.bf16.mxu0 %v1053
    %1083 = vmatpush1.bf16.msra.mxu0 %v1052
    %1084 = vmatprep.subr.bf16.mxu0 %v1051
    %1085 = vmatpush1.bf16.msra.mxu0 %v1050
    %1086 = vmatprep.subr.bf16.mxu0 %v1049
    %1087 = vmatpush1.bf16.msra.mxu0 %v1048
    %1088 = vmatprep.subr.bf16.mxu0 %v1047
    %1089 = vmatpush1.bf16.msra.mxu0 %v1046
    %1090 = vmatprep.subr.bf16.mxu0 %v1045
    %1091 = vmatpush1.bf16.msra.mxu0 %v1044
    %1092 = vmatprep.subr.bf16.mxu0 0
    %1093 = vmatpush2.bf16.msra.mxu0 0
    %1094 = vmatprep.subr.bf16.mxu0 0
    %1095 = vmatpush2.bf16.msra.mxu0 0
    %1096 = vmatprep.subr.bf16.mxu0 0
    %1097 = vmatpush2.bf16.msra.mxu0 0
    %1098 = vmatprep.subr.bf16.mxu0 0
    %1099 = vmatpush2.bf16.msra.mxu0 0
    %1100 = vmatprep.subr.bf16.mxu0 0
    %1101 = vmatpush2.bf16.msra.mxu0 0
    %1102 = vmatprep.subr.bf16.mxu0 0
    %1103 = vmatpush2.bf16.msra.mxu0 0
    %1104 = vmatprep.subr.bf16.mxu0 0
    %1105 = vmatpush2.bf16.msra.mxu0 0
    %1106 = vmatprep.subr.bf16.mxu0 0
    %1107 = vmatpush2.bf16.msra.mxu0 0
    %1108 = vmatprep.mubr.bf16.mxu0 0
    %1109 = vmatmul.mubr.bf16.gmra.mxu0 %v978
    %v1110 = vpop.f32.mrf.mxu0
    %v1111 = vadd.f32 0.0, %v1110
    %v1112 = vpop.f32.mrf.mxu0
    %v1113 = vadd.f32 0.0, %v1112
    %v1114 = vpop.f32.mrf.mxu0
    %v1115 = vpop.f32.mrf.mxu0
    %1116 = vdwg.mxu0
    %v1117 = vadd.f32 %v970, %v1111
    %v1118 = vadd.f32 %v971, %v1113
    %1119 = vset.pattern.permute.xlu0 6
    %1120 = vperm.xlu0 %1119, %v116
    %v1121 = vpop.permute.xlu0 %1120
    %vm1122 = vcmp.eq.s32.totalorder %v1121, %v118
    %v1123 = vsel %vm1122, 1, 0
    %v1124 = vcvt.s32.f32 %v1123
    %v1125 = vpack.c.bf16 %v1124, %v1124
    %s1126 = scalar_lea.vmem [#allocation9], 768
    %v1127 = vld [vmem:[%s1126] sm:$0xff]
    %v1128 = vld [vmem:[%s1126 + $0x8] sm:$0xff]
    %v1129 = vld [vmem:[%s1126 + $0x10] sm:$0xff]
    %v1130 = vld [vmem:[%s1126 + $0x18] sm:$0xff]
    %v1131 = vld [vmem:[%s1126 + $0x20] sm:$0xff]
    %v1132 = vld [vmem:[%s1126 + $0x28] sm:$0xff]
    %v1133 = vld [vmem:[%s1126 + $0x30] sm:$0xff]
    %v1134 = vld [vmem:[%s1126 + $0x38] sm:$0xff]
    %v1135 = vld [vmem:[%s1126 + $0x40] sm:$0xff]
    %v1136 = vld [vmem:[%s1126 + $0x48] sm:$0xff]
    %v1137 = vld [vmem:[%s1126 + $0x50] sm:$0xff]
    %v1138 = vld [vmem:[%s1126 + $0x58] sm:$0xff]
    %v1139 = vld [vmem:[%s1126 + $0x60] sm:$0xff]
    %v1140 = vld [vmem:[%s1126 + $0x68] sm:$0xff]
    %v1141 = vld [vmem:[%s1126 + $0x70] sm:$0xff]
    %v1142 = vld [vmem:[%s1126 + $0x78] sm:$0xff]
    %v1159 = vunpack.c.l.b16 %v1127
    %v1160 = vunpack.c.h.b16 %v1127
    %v1161 = vunpack.c.l.b16 %v1128
    %v1162 = vunpack.c.h.b16 %v1128
    %v1163 = vunpack.c.l.b16 %v1129
    %v1164 = vunpack.c.h.b16 %v1129
    %v1165 = vunpack.c.l.b16 %v1130
    %v1166 = vunpack.c.h.b16 %v1130
    %v1167 = vunpack.c.l.b16 %v1131
    %v1168 = vunpack.c.h.b16 %v1131
    %v1169 = vunpack.c.l.b16 %v1132
    %v1170 = vunpack.c.h.b16 %v1132
    %v1171 = vunpack.c.l.b16 %v1133
    %v1172 = vunpack.c.h.b16 %v1133
    %v1173 = vunpack.c.l.b16 %v1134
    %v1174 = vunpack.c.h.b16 %v1134
    %v1175 = vunpack.c.l.b16 %v1135
    %v1176 = vunpack.c.h.b16 %v1135
    %v1177 = vunpack.c.l.b16 %v1136
    %v1178 = vunpack.c.h.b16 %v1136
    %v1179 = vunpack.c.l.b16 %v1137
    %v1180 = vunpack.c.h.b16 %v1137
    %v1181 = vunpack.c.l.b16 %v1138
    %v1182 = vunpack.c.h.b16 %v1138
    %v1183 = vunpack.c.l.b16 %v1139
    %v1184 = vunpack.c.h.b16 %v1139
    %v1185 = vunpack.c.l.b16 %v1140
    %v1186 = vunpack.c.h.b16 %v1140
    %v1187 = vunpack.c.l.b16 %v1141
    %v1188 = vunpack.c.h.b16 %v1141
    %v1189 = vunpack.c.l.b16 %v1142
    %v1190 = vunpack.c.h.b16 %v1142
    %v1191 = vpack.c.b16 %v1161, %v1159
    %v1192 = vpack.c.b16 %v1162, %v1160
    %v1193 = vpack.c.b16 %v1165, %v1163
    %v1194 = vpack.c.b16 %v1166, %v1164
    %v1195 = vpack.c.b16 %v1169, %v1167
    %v1196 = vpack.c.b16 %v1170, %v1168
    %v1197 = vpack.c.b16 %v1173, %v1171
    %v1198 = vpack.c.b16 %v1174, %v1172
    %v1199 = vpack.c.b16 %v1177, %v1175
    %v1200 = vpack.c.b16 %v1178, %v1176
    %v1201 = vpack.c.b16 %v1181, %v1179
    %v1202 = vpack.c.b16 %v1182, %v1180
    %v1203 = vpack.c.b16 %v1185, %v1183
    %v1204 = vpack.c.b16 %v1186, %v1184
    %v1205 = vpack.c.b16 %v1189, %v1187
    %v1206 = vpack.c.b16 %v1190, %v1188
    %1223 = vmatprep.subr.bf16.mxu0 %v1206
    %1224 = vmatpush1.bf16.msra.mxu0 %v1205
    %1225 = vmatprep.subr.bf16.mxu0 %v1204
    %1226 = vmatpush1.bf16.msra.mxu0 %v1203
    %1227 = vmatprep.subr.bf16.mxu0 %v1202
    %1228 = vmatpush1.bf16.msra.mxu0 %v1201
    %1229 = vmatprep.subr.bf16.mxu0 %v1200
    %1230 = vmatpush1.bf16.msra.mxu0 %v1199
    %1231 = vmatprep.subr.bf16.mxu0 %v1198
    %1232 = vmatpush1.bf16.msra.mxu0 %v1197
    %1233 = vmatprep.subr.bf16.mxu0 %v1196
    %1234 = vmatpush1.bf16.msra.mxu0 %v1195
    %1235 = vmatprep.subr.bf16.mxu0 %v1194
    %1236 = vmatpush1.bf16.msra.mxu0 %v1193
    %1237 = vmatprep.subr.bf16.mxu0 %v1192
    %1238 = vmatpush1.bf16.msra.mxu0 %v1191
    %1239 = vmatprep.subr.bf16.mxu0 0
    %1240 = vmatpush2.bf16.msra.mxu0 0
    %1241 = vmatprep.subr.bf16.mxu0 0
    %1242 = vmatpush2.bf16.msra.mxu0 0
    %1243 = vmatprep.subr.bf16.mxu0 0
    %1244 = vmatpush2.bf16.msra.mxu0 0
    %1245 = vmatprep.subr.bf16.mxu0 0
    %1246 = vmatpush2.bf16.msra.mxu0 0
    %1247 = vmatprep.subr.bf16.mxu0 0
    %1248 = vmatpush2.bf16.msra.mxu0 0
    %1249 = vmatprep.subr.bf16.mxu0 0
    %1250 = vmatpush2.bf16.msra.mxu0 0
    %1251 = vmatprep.subr.bf16.mxu0 0
    %1252 = vmatpush2.bf16.msra.mxu0 0
    %1253 = vmatprep.subr.bf16.mxu0 0
    %1254 = vmatpush2.bf16.msra.mxu0 0
    %1255 = vmatprep.mubr.bf16.mxu0 0
    %1256 = vmatmul.mubr.bf16.gmra.mxu0 %v1125
    %v1257 = vpop.f32.mrf.mxu0
    %v1258 = vadd.f32 0.0, %v1257
    %v1259 = vpop.f32.mrf.mxu0
    %v1260 = vadd.f32 0.0, %v1259
    %v1261 = vpop.f32.mrf.mxu0
    %v1262 = vpop.f32.mrf.mxu0
    %1263 = vdwg.mxu0
    %v1264 = vadd.f32 %v1117, %v1258
    %v1265 = vadd.f32 %v1118, %v1260
    %1266 = vset.pattern.permute.xlu0 7
    %1267 = vperm.xlu0 %1266, %v116
    %v1268 = vpop.permute.xlu0 %1267
    %vm1269 = vcmp.eq.s32.totalorder %v1268, %v118
    %v1270 = vsel %vm1269, 1, 0
    %v1271 = vcvt.s32.f32 %v1270
    %v1272 = vpack.c.bf16 %v1271, %v1271
    %s1273 = scalar_lea.vmem [#allocation9], 896
    %v1274 = vld [vmem:[%s1273] sm:$0xff]
    %v1275 = vld [vmem:[%s1273 + $0x8] sm:$0xff]
    %v1276 = vld [vmem:[%s1273 + $0x10] sm:$0xff]
    %v1277 = vld [vmem:[%s1273 + $0x18] sm:$0xff]
    %v1278 = vld [vmem:[%s1273 + $0x20] sm:$0xff]
    %v1279 = vld [vmem:[%s1273 + $0x28] sm:$0xff]
    %v1280 = vld [vmem:[%s1273 + $0x30] sm:$0xff]
    %v1281 = vld [vmem:[%s1273 + $0x38] sm:$0xff]
    %v1282 = vld [vmem:[%s1273 + $0x40] sm:$0xff]
    %v1283 = vld [vmem:[%s1273 + $0x48] sm:$0xff]
    %v1284 = vld [vmem:[%s1273 + $0x50] sm:$0xff]
    %v1285 = vld [vmem:[%s1273 + $0x58] sm:$0xff]
    %v1286 = vld [vmem:[%s1273 + $0x60] sm:$0xff]
    %v1287 = vld [vmem:[%s1273 + $0x68] sm:$0xff]
    %v1288 = vld [vmem:[%s1273 + $0x70] sm:$0xff]
    %v1289 = vld [vmem:[%s1273 + $0x78] sm:$0xff]
    %v1306 = vunpack.c.l.b16 %v1274
    %v1307 = vunpack.c.h.b16 %v1274
    %v1308 = vunpack.c.l.b16 %v1275
    %v1309 = vunpack.c.h.b16 %v1275
    %v1310 = vunpack.c.l.b16 %v1276
    %v1311 = vunpack.c.h.b16 %v1276
    %v1312 = vunpack.c.l.b16 %v1277
    %v1313 = vunpack.c.h.b16 %v1277
    %v1314 = vunpack.c.l.b16 %v1278
    %v1315 = vunpack.c.h.b16 %v1278
    %v1316 = vunpack.c.l.b16 %v1279
    %v1317 = vunpack.c.h.b16 %v1279
    %v1318 = vunpack.c.l.b16 %v1280
    %v1319 = vunpack.c.h.b16 %v1280
    %v1320 = vunpack.c.l.b16 %v1281
    %v1321 = vunpack.c.h.b16 %v1281
    %v1322 = vunpack.c.l.b16 %v1282
    %v1323 = vunpack.c.h.b16 %v1282
    %v1324 = vunpack.c.l.b16 %v1283
    %v1325 = vunpack.c.h.b16 %v1283
    %v1326 = vunpack.c.l.b16 %v1284
    %v1327 = vunpack.c.h.b16 %v1284
    %v1328 = vunpack.c.l.b16 %v1285
    %v1329 = vunpack.c.h.b16 %v1285
    %v1330 = vunpack.c.l.b16 %v1286
    %v1331 = vunpack.c.h.b16 %v1286
    %v1332 = vunpack.c.l.b16 %v1287
    %v1333 = vunpack.c.h.b16 %v1287
    %v1334 = vunpack.c.l.b16 %v1288
    %v1335 = vunpack.c.h.b16 %v1288
    %v1336 = vunpack.c.l.b16 %v1289
    %v1337 = vunpack.c.h.b16 %v1289
    %v1338 = vpack.c.b16 %v1308, %v1306
    %v1339 = vpack.c.b16 %v1309, %v1307
    %v1340 = vpack.c.b16 %v1312, %v1310
    %v1341 = vpack.c.b16 %v1313, %v1311
    %v1342 = vpack.c.b16 %v1316, %v1314
    %v1343 = vpack.c.b16 %v1317, %v1315
    %v1344 = vpack.c.b16 %v1320, %v1318
    %v1345 = vpack.c.b16 %v1321, %v1319
    %v1346 = vpack.c.b16 %v1324, %v1322
    %v1347 = vpack.c.b16 %v1325, %v1323
    %v1348 = vpack.c.b16 %v1328, %v1326
    %v1349 = vpack.c.b16 %v1329, %v1327
    %v1350 = vpack.c.b16 %v1332, %v1330
    %v1351 = vpack.c.b16 %v1333, %v1331
    %v1352 = vpack.c.b16 %v1336, %v1334
    %v1353 = vpack.c.b16 %v1337, %v1335
    %1370 = vmatprep.subr.bf16.mxu0 %v1353
    %1371 = vmatpush1.bf16.msra.mxu0 %v1352
    %1372 = vmatprep.subr.bf16.mxu0 %v1351
    %1373 = vmatpush1.bf16.msra.mxu0 %v1350
    %1374 = vmatprep.subr.bf16.mxu0 %v1349
    %1375 = vmatpush1.bf16.msra.mxu0 %v1348
    %1376 = vmatprep.subr.bf16.mxu0 %v1347
    %1377 = vmatpush1.bf16.msra.mxu0 %v1346
    %1378 = vmatprep.subr.bf16.mxu0 %v1345
    %1379 = vmatpush1.bf16.msra.mxu0 %v1344
    %1380 = vmatprep.subr.bf16.mxu0 %v1343
    %1381 = vmatpush1.bf16.msra.mxu0 %v1342
    %1382 = vmatprep.subr.bf16.mxu0 %v1341
    %1383 = vmatpush1.bf16.msra.mxu0 %v1340
    %1384 = vmatprep.subr.bf16.mxu0 %v1339
    %1385 = vmatpush1.bf16.msra.mxu0 %v1338
    %1386 = vmatprep.subr.bf16.mxu0 0
    %1387 = vmatpush2.bf16.msra.mxu0 0
    %1388 = vmatprep.subr.bf16.mxu0 0
    %1389 = vmatpush2.bf16.msra.mxu0 0
    %1390 = vmatprep.subr.bf16.mxu0 0
    %1391 = vmatpush2.bf16.msra.mxu0 0
    %1392 = vmatprep.subr.bf16.mxu0 0
    %1393 = vmatpush2.bf16.msra.mxu0 0
    %1394 = vmatprep.subr.bf16.mxu0 0
    %1395 = vmatpush2.bf16.msra.mxu0 0
    %1396 = vmatprep.subr.bf16.mxu0 0
    %1397 = vmatpush2.bf16.msra.mxu0 0
    %1398 = vmatprep.subr.bf16.mxu0 0
    %1399 = vmatpush2.bf16.msra.mxu0 0
    %1400 = vmatprep.subr.bf16.mxu0 0
    %1401 = vmatpush2.bf16.msra.mxu0 0
    %1402 = vmatprep.mubr.bf16.mxu0 0
    %1403 = vmatmul.mubr.bf16.gmra.mxu0 %v1272
    %v1404 = vpop.f32.mrf.mxu0
    %v1405 = vadd.f32 0.0, %v1404
    %v1406 = vpop.f32.mrf.mxu0
    %v1407 = vadd.f32 0.0, %v1406
    %v1408 = vpop.f32.mrf.mxu0
    %v1409 = vpop.f32.mrf.mxu0
    %1410 = vdwg.mxu0
    %v1411 = vadd.f32 %v1264, %v1405
    %v1412 = vadd.f32 %v1265, %v1407
    %v1413 = vld [vmem:[%s3] sm:$0x3]
    %v1415 = vlaneseq
    %v1416 = vshrl.u32 %v1415, 7
    %v1417 = vsub.s32 0, %v1416
    %v1418 = vrot.slane %v1413, %v1417
    %v1419 = vlaneseq
    %v1420 = vshrl.u32 %v1419, 7
    %v1421 = vsub.s32 1, %v1420
    %v1422 = vrot.slane %v1413, %v1421
    %v1425 = vadd.f32 %v1411, %v1418
    %v1426 = vadd.f32 %v1412, %v1422
    %v1427 = vmax.f32 %v1425, 0.0
    %v1428 = vmax.f32 %v1426, 0.0
    %v1429 = vpack.c.bf16 %v1427, %v1427
    %v1430 = vpack.c.bf16 %v1428, %v1428
    %v1431 = vld [vmem:[#allocation11] sm:$0xf]
    %v1432 = vld [vmem:[#allocation11 + $0x4] sm:$0xf]
    %v1433 = vld [vmem:[#allocation11 + $0x8] sm:$0xf]
    %v1434 = vld [vmem:[#allocation11 + $0xc] sm:$0xf]
    %v1435 = vld [vmem:[#allocation11 + $0x10] sm:$0xf]
    %v1436 = vld [vmem:[#allocation11 + $0x14] sm:$0xf]
    %v1437 = vld [vmem:[#allocation11 + $0x18] sm:$0xf]
    %v1438 = vld [vmem:[#allocation11 + $0x1c] sm:$0xf]
    %v1439 = vld [vmem:[#allocation11 + $0x20] sm:$0xf]
    %v1440 = vld [vmem:[#allocation11 + $0x24] sm:$0xf]
    %v1441 = vld [vmem:[#allocation11 + $0x28] sm:$0xf]
    %v1442 = vld [vmem:[#allocation11 + $0x2c] sm:$0xf]
    %v1443 = vld [vmem:[#allocation11 + $0x30] sm:$0xf]
    %v1444 = vld [vmem:[#allocation11 + $0x34] sm:$0xf]
    %v1445 = vld [vmem:[#allocation11 + $0x38] sm:$0xf]
    %v1446 = vld [vmem:[#allocation11 + $0x3c] sm:$0xf]
    %v1447 = vld [vmem:[#allocation11 + $0x40] sm:$0xf]
    %v1448 = vld [vmem:[#allocation11 + $0x44] sm:$0xf]
    %v1449 = vld [vmem:[#allocation11 + $0x48] sm:$0xf]
    %v1450 = vld [vmem:[#allocation11 + $0x4c] sm:$0xf]
    %v1451 = vld [vmem:[#allocation11 + $0x50] sm:$0xf]
    %v1452 = vld [vmem:[#allocation11 + $0x54] sm:$0xf]
    %v1453 = vld [vmem:[#allocation11 + $0x58] sm:$0xf]
    %v1454 = vld [vmem:[#allocation11 + $0x5c] sm:$0xf]
    %v1455 = vld [vmem:[#allocation11 + $0x60] sm:$0xf]
    %v1456 = vld [vmem:[#allocation11 + $0x64] sm:$0xf]
    %v1457 = vld [vmem:[#allocation11 + $0x68] sm:$0xf]
    %v1458 = vld [vmem:[#allocation11 + $0x6c] sm:$0xf]
    %v1459 = vld [vmem:[#allocation11 + $0x70] sm:$0xf]
    %v1460 = vld [vmem:[#allocation11 + $0x74] sm:$0xf]
    %v1461 = vld [vmem:[#allocation11 + $0x78] sm:$0xf]
    %v1462 = vld [vmem:[#allocation11 + $0x7c] sm:$0xf]
    %v1463 = vld [vmem:[%s6] sm:$0x1]
    %v1465 = vlaneseq
    %v1466 = vshrl.u32 %v1465, 7
    %v1467 = vsub.s32 0, %v1466
    %v1468 = vrot.slane %v1463, %v1467
    %v1502 = vunpack.c.l.b16 %v1431
    %v1503 = vunpack.c.l.b16 %v1432
    %v1504 = vunpack.c.l.b16 %v1433
    %v1505 = vunpack.c.l.b16 %v1434
    %v1506 = vunpack.c.l.b16 %v1435
    %v1507 = vunpack.c.l.b16 %v1436
    %v1508 = vunpack.c.l.b16 %v1437
    %v1509 = vunpack.c.l.b16 %v1438
    %v1510 = vunpack.c.l.b16 %v1439
    %v1511 = vunpack.c.l.b16 %v1440
    %v1512 = vunpack.c.l.b16 %v1441
    %v1513 = vunpack.c.l.b16 %v1442
    %v1514 = vunpack.c.l.b16 %v1443
    %v1515 = vunpack.c.l.b16 %v1444
    %v1516 = vunpack.c.l.b16 %v1445
    %v1517 = vunpack.c.l.b16 %v1446
    %v1518 = vunpack.c.l.b16 %v1447
    %v1519 = vunpack.c.l.b16 %v1448
    %v1520 = vunpack.c.l.b16 %v1449
    %v1521 = vunpack.c.l.b16 %v1450
    %v1522 = vunpack.c.l.b16 %v1451
    %v1523 = vunpack.c.l.b16 %v1452
    %v1524 = vunpack.c.l.b16 %v1453
    %v1525 = vunpack.c.l.b16 %v1454
    %v1526 = vunpack.c.l.b16 %v1455
    %v1527 = vunpack.c.l.b16 %v1456
    %v1528 = vunpack.c.l.b16 %v1457
    %v1529 = vunpack.c.l.b16 %v1458
    %v1530 = vunpack.c.l.b16 %v1459
    %v1531 = vunpack.c.l.b16 %v1460
    %v1532 = vunpack.c.l.b16 %v1461
    %v1533 = vunpack.c.l.b16 %v1462
    %v1534 = vpack.c.b16 %v1503, %v1502
    %v1535 = vpack.c.b16 %v1505, %v1504
    %v1536 = vpack.c.b16 %v1507, %v1506
    %v1537 = vpack.c.b16 %v1509, %v1508
    %v1538 = vpack.c.b16 %v1511, %v1510
    %v1539 = vpack.c.b16 %v1513, %v1512
    %v1540 = vpack.c.b16 %v1515, %v1514
    %v1541 = vpack.c.b16 %v1517, %v1516
    %v1542 = vpack.c.b16 %v1519, %v1518
    %v1543 = vpack.c.b16 %v1521, %v1520
    %v1544 = vpack.c.b16 %v1523, %v1522
    %v1545 = vpack.c.b16 %v1525, %v1524
    %v1546 = vpack.c.b16 %v1527, %v1526
    %v1547 = vpack.c.b16 %v1529, %v1528
    %v1548 = vpack.c.b16 %v1531, %v1530
    %v1549 = vpack.c.b16 %v1533, %v1532
    %1566 = vmatprep.subr.bf16.mxu0 0
    %1567 = vmatpush1.bf16.msra.mxu0 %v1541
    %1568 = vmatprep.subr.bf16.mxu0 0
    %1569 = vmatpush1.bf16.msra.mxu0 %v1540
    %1570 = vmatprep.subr.bf16.mxu0 0
    %1571 = vmatpush1.bf16.msra.mxu0 %v1539
    %1572 = vmatprep.subr.bf16.mxu0 0
    %1573 = vmatpush1.bf16.msra.mxu0 %v1538
    %1574 = vmatprep.subr.bf16.mxu0 0
    %1575 = vmatpush1.bf16.msra.mxu0 %v1537
    %1576 = vmatprep.subr.bf16.mxu0 0
    %1577 = vmatpush1.bf16.msra.mxu0 %v1536
    %1578 = vmatprep.subr.bf16.mxu0 0
    %1579 = vmatpush1.bf16.msra.mxu0 %v1535
    %1580 = vmatprep.subr.bf16.mxu0 0
    %1581 = vmatpush1.bf16.msra.mxu0 %v1534
    %1582 = vmatprep.subr.bf16.mxu0 0
    %1583 = vmatpush2.bf16.msra.mxu0 %v1549
    %1584 = vmatprep.subr.bf16.mxu0 0
    %1585 = vmatpush2.bf16.msra.mxu0 %v1548
    %1586 = vmatprep.subr.bf16.mxu0 0
    %1587 = vmatpush2.bf16.msra.mxu0 %v1547
    %1588 = vmatprep.subr.bf16.mxu0 0
    %1589 = vmatpush2.bf16.msra.mxu0 %v1546
    %1590 = vmatprep.subr.bf16.mxu0 0
    %1591 = vmatpush2.bf16.msra.mxu0 %v1545
    %1592 = vmatprep.subr.bf16.mxu0 0
    %1593 = vmatpush2.bf16.msra.mxu0 %v1544
    %1594 = vmatprep.subr.bf16.mxu0 0
    %1595 = vmatpush2.bf16.msra.mxu0 %v1543
    %1596 = vmatprep.subr.bf16.mxu0 0
    %1597 = vmatpush2.bf16.msra.mxu0 %v1542
    %1598 = vmatprep.mubr.bf16.mxu0 %v1430
    %1599 = vmatmul.mubr.bf16.gmra.mxu0 %v1429
    %v1600 = vpop.f32.mrf.mxu0
    %v1601 = vadd.f32 %v1468, %v1600
    %v1602 = vpop.f32.mrf.mxu0
    %v1603 = vpop.f32.mrf.mxu0
    %v1604 = vpop.f32.mrf.mxu0
    %1605 = vdwg.mxu0
    %v1606 = vmax.f32 %v1601, 0.0
    %v1607 = vld [vmem:[%s7] sm:$0x1]
    %v1609 = vlaneseq
    %v1610 = vshrl.u32 %v1609, 7
    %v1611 = vsub.s32 0, %v1610
    %v1612 = vrot.slane %v1607, %v1611
    %v1614 = vmul.f32 %v1606, %v1612
    %1615 = vadd.xlane.f32.xlu0 %v1614
    %v1616 = vpop.xlane.xlu0 %1615
    %s1617 = sld [smem:[#allocation2]]
    %v1618 = vstv %s1617
    %v1619 = vadd.f32 %v1616, %v1618
    %1620 = vst [vmem:[#allocation12] sm:$0xff] %v1619
    // Predicated region
    $region58: #{tpu_custom_call.1} parent=1 // pred_check
      _
    $region59: #{tpu_custom_call.1} parent=1 // pred_check_branch
      %1622 = sbr.rel (0) target = $region61
    $region60: #{tpu_custom_call.1} parent=1 // pred_region
      %s1624 = ssub.s32 128, 128
      %1625 = vsyncadd [#allocation5], %s1624
      %s1627 = sshll.u32 [#allocation12], 4
      %s1628 = int_to_ptr.vmem [resolvable:$true] %s1627
      %1630 = dma.vmem_to_hbm [thread:$0]  %s1628, 128, %s9, [#allocation5]
    $region61: #{tpu_custom_call.1} parent=1 // pred_fallthru
      _
    // Predicated region
    $region62: #{tpu_custom_call.1} parent=1 // pred_check
      _
    $region63: #{tpu_custom_call.1} parent=1 // pred_check_branch
      %1632 = sbr.rel (0) target = $region65
    $region64: #{tpu_custom_call.1} parent=1 // pred_region
      %1633 = dma.done [#allocation5], 128
    $region65: #{tpu_custom_call.1} parent=1 // pred_fallthru
      _
    %1634 = vsyncpa [#allocation4], 1
    %1635 = vsyncpa [#allocation7], 1
    %1636 = vsyncpa [#allocation10], 1
    %1637 = vsyncpa [#allocation5], 1

</llo_original>
